<compile_context>
chip_gen: v6e
topology: v6e:2x2x1
jax: 0.10.0
libtpu: 0.0.40
codegen_flags: <defaults>
</compile_context>

<pallas_src>
import numpy as np
import jax
import jax.numpy as jnp
from jax.experimental import pallas as pl
from jax.experimental.pallas import tpu as pltpu


def make_mha_kernel(n_head, d_k, d_v, d_model, batch_tile, seq_len,
                    eps=1e-5, compute_dtype=jnp.bfloat16):
    bt, L = batch_tile, seq_len

    def kernel(q_ref, k_ref, v_ref,
               wq_ref, bq_ref, wk_ref, bk_ref, wv_ref, bv_ref,
               wf_ref, bf_ref, gamma_ref, beta_ref,
               o_ref):
        # Inputs are already bf16; flatten (bt, L, d_model) -> (bt*L, d_model).
        q2 = q_ref[...].reshape(bt * L, d_model)
        k2 = k_ref[...].reshape(bt * L, d_model)
        v2 = v_ref[...].reshape(bt * L, d_model)

        # Fused all-head projections (fat N = n_head*d_k / n_head*d_v).
        # Wq / bq already carry the 1/temperature factor.
        qp = (jnp.dot(q2, wq_ref[...], preferred_element_type=jnp.float32)
              + bq_ref[...]).astype(compute_dtype).reshape(bt, L, n_head * d_k)
        kp = (jnp.dot(k2, wk_ref[...], preferred_element_type=jnp.float32)
              + bk_ref[...]).astype(compute_dtype).reshape(bt, L, n_head * d_k)
        vp = (jnp.dot(v2, wv_ref[...], preferred_element_type=jnp.float32)
              + bv_ref[...]).astype(compute_dtype).reshape(bt, L, n_head * d_v)

        # Per-head scaled dot-product attention (static Python unroll; all head
        # slices are static, so no dynamic lane offsets).
        ctx_heads = []
        for h in range(n_head):
            qh = qp[:, :, h * d_k:(h + 1) * d_k]
            kh = kp[:, :, h * d_k:(h + 1) * d_k]
            vh = vp[:, :, h * d_v:(h + 1) * d_v]
            s = jnp.einsum("bqd,bkd->bqk", qh, kh,
                           preferred_element_type=jnp.float32)      # (bt, L, L)
            m = jnp.max(s, axis=-1, keepdims=True)
            e = jnp.exp(s - m)
            p = e * pl.reciprocal(jnp.sum(e, axis=-1, keepdims=True), approx=True)
            # dropout (dr_sdp) -> identity in eval mode
            ctx_heads.append(
                jnp.einsum("bqk,bkd->bqd", p.astype(compute_dtype), vh,
                           preferred_element_type=jnp.float32).astype(compute_dtype))
        ctx = jnp.concatenate(ctx_heads, axis=-1)          # (bt, L, n_head*d_v)

        # Fused output projection (deep K = n_head*d_v) + bias + residual + LN.
        out = jnp.dot(ctx.reshape(bt * L, n_head * d_v), wf_ref[...],
                      preferred_element_type=jnp.float32).reshape(bt, L, d_model)
        # dropout (dr_mha) -> identity in eval mode
        out = out + bf_ref[...] + q_ref[...].astype(jnp.float32)
        mean = jnp.mean(out, axis=-1, keepdims=True)
        var = jnp.mean(jnp.square(out - mean), axis=-1, keepdims=True)
        norm = (out - mean) * jax.lax.rsqrt(var + eps)
        o_ref[...] = (norm * gamma_ref[...] + beta_ref[...]).astype(o_ref.dtype)

    return kernel


def _vmem_capacity_bytes():
    """Physical VMEM of the current chip; conservative (v7x) fallback."""
    try:
        return int(pltpu.get_tpu_info().vmem_capacity_bytes)
    except Exception:
        return 64 << 20


def _pick_batch_tile(B, L, d_model, n_head, d_k, d_v, vmem_budget_bytes,
                     want_min_tiles=2):
    """Largest batch tile whose working set fits the VMEM budget.

    Accounts for double-buffered bf16 act blocks, the f32 output block, the
    f32+bf16 projection / context temporaries, the per-head logits/exp/p
    temporaries, and the resident bf16 weights.  Prefers >= `want_min_tiles`
    grid steps so the parallel batch axis can be sharded across v7x's 2 TCs.
    """
    dqk, dvv = n_head * d_k, n_head * d_v

    def tile_bytes(bt):
        rows = bt * L
        act = 3 * rows * d_model * 2 * 2           # bf16 q/k/v, double-buffered
        outb = rows * d_model * 4 * 2              # f32 out block, double-buffered
        proj = rows * (2 * dqk + dvv) * (4 + 2)    # f32 + bf16 qp/kp/vp
        ctx = rows * dvv * (4 + 2)                 # f32 head ctx + bf16 concat
        logit = bt * L * L * 4 * 3                 # s / exp / p (one head live)
        ln = rows * d_model * 4 * 2                # residual-sum + norm temps
        return act + outb + proj + ctx + logit + ln

    weights = (d_model * (2 * dqk + dvv) + dvv * d_model) * 2 \
              + (2 * dqk + dvv + 3 * d_model) * 4
    budget = max(vmem_budget_bytes - weights, 1 << 20)

    per_bt = tile_bytes(1)                         # tile_bytes is linear in bt
    bt = max(1, budget // per_bt)
    if B >= want_min_tiles:
        bt = min(bt, B // want_min_tiles)          # keep >= 2 grid steps (v7x)
    bt = min(B, int(bt))
    while B % bt:                                  # keep the grid exact
        bt -= 1
    return int(bt)


def prepare_params(params, n_head, d_k, d_v, compute_dtype=jnp.bfloat16):
    """One-time wrapper-side transpose / scale / cast of PyTorch-layout params."""
    wq, bq, wk, bk, wv, bv, wf, bf, gamma, beta = params
    temperature = float(np.power(d_k, 0.5))

    # PyTorch Linear weights are (out_features, in_features); kernel wants
    # (in_features, out_features) so `x @ W` needs no in-kernel transpose.
    wq_f = (wq.T / temperature).astype(compute_dtype)   # (d_model, n_head*d_k)
    wk_f = wk.T.astype(compute_dtype)                   # (d_model, n_head*d_k)
    wv_f = wv.T.astype(compute_dtype)                   # (d_model, n_head*d_v)
    wf_f = wf.T.astype(compute_dtype)                   # (n_head*d_v, d_model)

    bq_f = (bq / temperature).reshape(1, -1).astype(jnp.float32)
    bk_f = bk.reshape(1, -1).astype(jnp.float32)
    bv_f = bv.reshape(1, -1).astype(jnp.float32)
    bf_f = bf.reshape(1, -1).astype(jnp.float32)

    return (wq_f, bq_f, wk_f, bk_f, wv_f, bv_f, wf_f, bf_f,
            gamma.reshape(1, -1).astype(jnp.float32),
            beta.reshape(1, -1).astype(jnp.float32))


def multi_head_attention(q, k, v, prepared_params, n_head, d_k, d_v,
                         batch_tile=None, vmem_limit_bytes=None,
                         compute_dtype=jnp.bfloat16, out_dtype=jnp.float32):
    B, L, d_model = q.shape
    phys_vmem = _vmem_capacity_bytes()

    if batch_tile is None:
        batch_tile = _pick_batch_tile(B, L, d_model, n_head, d_k, d_v,
                                      vmem_budget_bytes=int(phys_vmem * 0.6))
    nb = B // batch_tile
    assert nb * batch_tile == B, "batch_tile must divide the batch size"

    if vmem_limit_bytes is None:
        # Generation-aware scoped VMEM: ~48 MiB on v7x (64 MiB phys),
        # ~96 MiB on v5e/v6e (128 MiB phys).
        vmem_limit_bytes = max(32 << 20, min(int(phys_vmem * 3 // 4), 112 << 20))

    (wq_f, bq_f, wk_f, bk_f, wv_f, bv_f, wf_f, bf_f, gamma, beta) = prepared_params

    kernel = make_mha_kernel(n_head, d_k, d_v, d_model, batch_tile, L,
                             compute_dtype=compute_dtype)

    # Activations enter the kernel in bf16 (halves HBM DMA and VMEM blocks).
    qb = q.astype(compute_dtype)
    kb = k.astype(compute_dtype)
    vb = v.astype(compute_dtype)

    act_spec_in = pl.BlockSpec((batch_tile, L, d_model), lambda b: (b, 0, 0))
    act_spec_out = pl.BlockSpec((batch_tile, L, d_model), lambda b: (b, 0, 0))

    def const_spec(arr):     # resident weights / biases: constant block index
        return pl.BlockSpec(arr.shape, lambda b: (0,) * arr.ndim)

    return pl.pallas_call(
        kernel,
        out_shape=jax.ShapeDtypeStruct((B, L, d_model), out_dtype),
        grid_spec=pltpu.PrefetchScalarGridSpec(
            num_scalar_prefetch=0,
            grid=(nb,),                               # batch tiles (parallel)
            in_specs=[
                act_spec_in, act_spec_in, act_spec_in,
                const_spec(wq_f), const_spec(bq_f),
                const_spec(wk_f), const_spec(bk_f),
                const_spec(wv_f), const_spec(bv_f),
                const_spec(wf_f), const_spec(bf_f),
                const_spec(gamma), const_spec(beta),
            ],
            out_specs=act_spec_out,
        ),
        compiler_params=pltpu.CompilerParams(
            dimension_semantics=("parallel",),
            vmem_limit_bytes=int(vmem_limit_bytes)),
    )(qb, kb, vb, wq_f, bq_f, wk_f, bk_f, wv_f, bv_f, wf_f, bf_f, gamma, beta)


def init_params(key, n_head, d_model, d_k, d_v):
    """PyTorch-layout parameters, matching the module's initializers."""
    ks = jax.random.split(key, 8)
    std_qk = np.sqrt(2.0 / (d_model + d_k))
    std_v = np.sqrt(2.0 / (d_model + d_v))
    std_fc = np.sqrt(2.0 / (n_head * d_v + d_model))   # xavier_normal_

    wq = std_qk * jax.random.normal(ks[0], (n_head * d_k, d_model), jnp.float32)
    wk = std_qk * jax.random.normal(ks[1], (n_head * d_k, d_model), jnp.float32)
    wv = std_v * jax.random.normal(ks[2], (n_head * d_v, d_model), jnp.float32)
    wf = std_fc * jax.random.normal(ks[3], (d_model, n_head * d_v), jnp.float32)

    bq = jax.random.uniform(ks[4], (1, n_head * d_k), jnp.float32,
                            -1.0 / np.sqrt(d_model), 1.0 / np.sqrt(d_model))
    bk = jax.random.uniform(ks[5], (1, n_head * d_k), jnp.float32,
                            -1.0 / np.sqrt(d_model), 1.0 / np.sqrt(d_model))
    bv = jax.random.uniform(ks[6], (1, n_head * d_v), jnp.float32,
                            -1.0 / np.sqrt(d_model), 1.0 / np.sqrt(d_model))
    bf = jax.random.uniform(ks[7], (1, d_model), jnp.float32,
                            -1.0 / np.sqrt(n_head * d_v), 1.0 / np.sqrt(n_head * d_v))

    gamma = jnp.ones((1, d_model), jnp.float32)
    beta = jnp.zeros((1, d_model), jnp.float32)
    return (wq, bq, wk, bk, wv, bv, wf, bf, gamma, beta)


def mha_reference(q, k, v, params, n_head, d_k, d_v, eps=1e-5):
    """Pure-JAX f32 reference of the PyTorch forward (eval mode)."""
    wq, bq, wk, bk, wv, bv, wf, bf, gamma, beta = params
    B, L, d_model = q.shape
    temperature = float(np.power(d_k, 0.5))
    qp = jnp.einsum("bld,fd->blf", q, wq) + bq
    kp = jnp.einsum("bld,fd->blf", k, wk) + bk
    vp = jnp.einsum("bld,fd->blf", v, wv) + bv
    qh = qp.reshape(B, L, n_head, d_k).transpose(0, 2, 1, 3)
    kh = kp.reshape(B, L, n_head, d_k).transpose(0, 2, 1, 3)
    vh = vp.reshape(B, L, n_head, d_v).transpose(0, 2, 1, 3)
    s = jnp.einsum("bhqd,bhkd->bhqk", qh, kh) / temperature
    p = jax.nn.softmax(s, axis=-1)
    ctx = jnp.einsum("bhqk,bhkd->bhqd", p, vh)
    ctx = ctx.transpose(0, 2, 1, 3).reshape(B, L, n_head * d_v)
    out = jnp.einsum("blf,df->bld", ctx, wf) + bf + q
    mean = out.mean(-1, keepdims=True)
    var = ((out - mean) ** 2).mean(-1, keepdims=True)
    return (out - mean) / jnp.sqrt(var + eps) * gamma + beta


if __name__ == "__main__":
    n_head, d_model, d_k, d_v = 2, 32, 16, 16
    B, L = 2, 8

    key = jax.random.PRNGKey(0)
    kq, kk, kv, kp = jax.random.split(key, 4)
    q = jax.random.normal(kq, (B, L, d_model), jnp.float32)
    k = jax.random.normal(kk, (B, L, d_model), jnp.float32)
    v = jax.random.normal(kv, (B, L, d_model), jnp.float32)

    params = init_params(kp, n_head, d_model, d_k, d_v)
    prepared = prepare_params(params, n_head, d_k, d_v)

    out = multi_head_attention(q, k, v, prepared, n_head, d_k, d_v)
    out = jax.block_until_ready(out)
    assert out.shape == (B, L, d_model)

    ref = jax.block_until_ready(mha_reference(q, k, v, params, n_head, d_k, d_v))
    err = float(jnp.max(jnp.abs(out - ref)))
    assert np.isfinite(err) and err < 0.2, f"mismatch vs f32 reference: {err}"

    print("KERNEL_OK")
</pallas_src>

<mosaic_0001>
module attributes {stable_mosaic.version = 11 : i64} {
  func.func @kernel(%arg0: i32, %arg1: memref<1x8x32xbf16, #tpu.memory_space<vmem>>, %arg2: memref<1x8x32xbf16, #tpu.memory_space<vmem>>, %arg3: memref<1x8x32xbf16, #tpu.memory_space<vmem>>, %arg4: memref<32x32xbf16, #tpu.memory_space<vmem>>, %arg5: memref<1x32xf32, #tpu.memory_space<vmem>>, %arg6: memref<32x32xbf16, #tpu.memory_space<vmem>>, %arg7: memref<1x32xf32, #tpu.memory_space<vmem>>, %arg8: memref<32x32xbf16, #tpu.memory_space<vmem>>, %arg9: memref<1x32xf32, #tpu.memory_space<vmem>>, %arg10: memref<32x32xbf16, #tpu.memory_space<vmem>>, %arg11: memref<1x32xf32, #tpu.memory_space<vmem>>, %arg12: memref<1x32xf32, #tpu.memory_space<vmem>>, %arg13: memref<1x32xf32, #tpu.memory_space<vmem>>, %arg14: memref<1x8x32xf32, #tpu.memory_space<vmem>>) attributes {dimension_semantics = [#tpu.dimension_semantics<parallel>], iteration_bounds = array<i64: 2>, scalar_prefetch = 0 : i64, scratch_operands = 0 : i64, tpu.core_type = #tpu.core_type<tc>, window_params = [{transform_indices = @transform_0, window_bounds = array<i64: 1, 8, 32>}, {transform_indices = @transform_1, window_bounds = array<i64: 1, 8, 32>}, {transform_indices = @transform_2, window_bounds = array<i64: 1, 8, 32>}, {pipeline_mode = #tpu.pipeline_mode<synchronous>, transform_indices = @transform_3, window_bounds = array<i64: 32, 32>}, {pipeline_mode = #tpu.pipeline_mode<synchronous>, transform_indices = @transform_4, window_bounds = array<i64: 1, 32>}, {pipeline_mode = #tpu.pipeline_mode<synchronous>, transform_indices = @transform_5, window_bounds = array<i64: 32, 32>}, {pipeline_mode = #tpu.pipeline_mode<synchronous>, transform_indices = @transform_6, window_bounds = array<i64: 1, 32>}, {pipeline_mode = #tpu.pipeline_mode<synchronous>, transform_indices = @transform_7, window_bounds = array<i64: 32, 32>}, {pipeline_mode = #tpu.pipeline_mode<synchronous>, transform_indices = @transform_8, window_bounds = array<i64: 1, 32>}, {pipeline_mode = #tpu.pipeline_mode<synchronous>, transform_indices = @transform_9, window_bounds = array<i64: 32, 32>}, {pipeline_mode = #tpu.pipeline_mode<synchronous>, transform_indices = @transform_10, window_bounds = array<i64: 1, 32>}, {pipeline_mode = #tpu.pipeline_mode<synchronous>, transform_indices = @transform_11, window_bounds = array<i64: 1, 32>}, {pipeline_mode = #tpu.pipeline_mode<synchronous>, transform_indices = @transform_12, window_bounds = array<i64: 1, 32>}, {transform_indices = @transform_13, window_bounds = array<i64: 1, 8, 32>}]} {
    %c0 = arith.constant 0 : index
    %c0_0 = arith.constant 0 : index
    %c0_1 = arith.constant 0 : index
    %0 = vector.load %arg1[%c0, %c0_0, %c0_1] : memref<1x8x32xbf16, #tpu.memory_space<vmem>>, vector<1x8x32xbf16>
    %1 = vector.shape_cast %0 : vector<1x8x32xbf16> to vector<8x32xbf16>
    %c0_2 = arith.constant 0 : index
    %c0_3 = arith.constant 0 : index
    %c0_4 = arith.constant 0 : index
    %2 = vector.load %arg2[%c0_2, %c0_3, %c0_4] : memref<1x8x32xbf16, #tpu.memory_space<vmem>>, vector<1x8x32xbf16>
    %3 = vector.shape_cast %2 : vector<1x8x32xbf16> to vector<8x32xbf16>
    %c0_5 = arith.constant 0 : index
    %c0_6 = arith.constant 0 : index
    %c0_7 = arith.constant 0 : index
    %4 = vector.load %arg3[%c0_5, %c0_6, %c0_7] : memref<1x8x32xbf16, #tpu.memory_space<vmem>>, vector<1x8x32xbf16>
    %5 = vector.shape_cast %4 : vector<1x8x32xbf16> to vector<8x32xbf16>
    %c0_8 = arith.constant 0 : index
    %c0_9 = arith.constant 0 : index
    %6 = vector.load %arg4[%c0_8, %c0_9] : memref<32x32xbf16, #tpu.memory_space<vmem>>, vector<32x32xbf16>
    %cst = arith.constant dense<0.000000e+00> : vector<8x32xf32>
    %7 = tpu.matmul %1, %6, %cst {dimension_numbers = #tpu.dot_dimension_numbers<[1], [0], [0], [1], [0, 0, 1, 1], [], []>} : vector<8x32xbf16>, vector<32x32xbf16>, vector<8x32xf32> -> vector<8x32xf32>
    %c0_10 = arith.constant 0 : index
    %c0_11 = arith.constant 0 : index
    %8 = vector.load %arg5[%c0_10, %c0_11] : memref<1x32xf32, #tpu.memory_space<vmem>>, vector<1x32xf32>
    %9 = vector.broadcast %8 : vector<1x32xf32> to vector<8x32xf32>
    %10 = arith.addf %7, %9 : vector<8x32xf32>
    %11 = arith.truncf %10 : vector<8x32xf32> to vector<8x32xbf16>
    %12 = vector.shape_cast %11 : vector<8x32xbf16> to vector<1x8x32xbf16>
    %c0_12 = arith.constant 0 : index
    %c0_13 = arith.constant 0 : index
    %13 = vector.load %arg6[%c0_12, %c0_13] : memref<32x32xbf16, #tpu.memory_space<vmem>>, vector<32x32xbf16>
    %cst_14 = arith.constant dense<0.000000e+00> : vector<8x32xf32>
    %14 = tpu.matmul %3, %13, %cst_14 {dimension_numbers = #tpu.dot_dimension_numbers<[1], [0], [0], [1], [0, 0, 1, 1], [], []>} : vector<8x32xbf16>, vector<32x32xbf16>, vector<8x32xf32> -> vector<8x32xf32>
    %c0_15 = arith.constant 0 : index
    %c0_16 = arith.constant 0 : index
    %15 = vector.load %arg7[%c0_15, %c0_16] : memref<1x32xf32, #tpu.memory_space<vmem>>, vector<1x32xf32>
    %16 = vector.broadcast %15 : vector<1x32xf32> to vector<8x32xf32>
    %17 = arith.addf %14, %16 : vector<8x32xf32>
    %18 = arith.truncf %17 : vector<8x32xf32> to vector<8x32xbf16>
    %19 = vector.shape_cast %18 : vector<8x32xbf16> to vector<1x8x32xbf16>
    %c0_17 = arith.constant 0 : index
    %c0_18 = arith.constant 0 : index
    %20 = vector.load %arg8[%c0_17, %c0_18] : memref<32x32xbf16, #tpu.memory_space<vmem>>, vector<32x32xbf16>
    %cst_19 = arith.constant dense<0.000000e+00> : vector<8x32xf32>
    %21 = tpu.matmul %5, %20, %cst_19 {dimension_numbers = #tpu.dot_dimension_numbers<[1], [0], [0], [1], [0, 0, 1, 1], [], []>} : vector<8x32xbf16>, vector<32x32xbf16>, vector<8x32xf32> -> vector<8x32xf32>
    %c0_20 = arith.constant 0 : index
    %c0_21 = arith.constant 0 : index
    %22 = vector.load %arg9[%c0_20, %c0_21] : memref<1x32xf32, #tpu.memory_space<vmem>>, vector<1x32xf32>
    %23 = vector.broadcast %22 : vector<1x32xf32> to vector<8x32xf32>
    %24 = arith.addf %21, %23 : vector<8x32xf32>
    %25 = arith.truncf %24 : vector<8x32xf32> to vector<8x32xbf16>
    %26 = vector.shape_cast %25 : vector<8x32xbf16> to vector<1x8x32xbf16>
    %27 = vector.extract_strided_slice %12 {offsets = [0, 0, 0], sizes = [1, 8, 16], strides = [1, 1, 1]} : vector<1x8x32xbf16> to vector<1x8x16xbf16>
    %28 = vector.extract_strided_slice %19 {offsets = [0, 0, 0], sizes = [1, 8, 16], strides = [1, 1, 1]} : vector<1x8x32xbf16> to vector<1x8x16xbf16>
    %29 = vector.extract_strided_slice %26 {offsets = [0, 0, 0], sizes = [1, 8, 16], strides = [1, 1, 1]} : vector<1x8x32xbf16> to vector<1x8x16xbf16>
    "tpu.trace_start"() <{level = 10 : i32, message = "bqd,bkd->bqk"}> : () -> ()
    %cst_22 = arith.constant dense<0.000000e+00> : vector<1x8x8xf32>
    %30 = tpu.matmul %27, %28, %cst_22 {dimension_numbers = #tpu.dot_dimension_numbers<[2], [2], [1], [1], [0, 0, 0, 1, 1, 1], [0], [0]>} : vector<1x8x16xbf16>, vector<1x8x16xbf16>, vector<1x8x8xf32> -> vector<1x8x8xf32>
    "tpu.trace_stop"() : () -> ()
    %cst_23 = arith.constant dense<0xFF800000> : vector<1x8xf32>
    %31 = vector.multi_reduction <maximumf>, %30, %cst_23 [2] : vector<1x8x8xf32> to vector<1x8xf32>
    %32 = vector.shape_cast %31 : vector<1x8xf32> to vector<1x8x1xf32>
    %33 = vector.broadcast %32 : vector<1x8x1xf32> to vector<1x8x8xf32>
    %34 = arith.subf %30, %33 : vector<1x8x8xf32>
    %35 = math.exp %34 : vector<1x8x8xf32>
    %cst_24 = arith.constant dense<0.000000e+00> : vector<1x8xf32>
    %36 = vector.multi_reduction <add>, %35, %cst_24 [2] : vector<1x8x8xf32> to vector<1x8xf32>
    %37 = vector.shape_cast %36 : vector<1x8xf32> to vector<1x8x1xf32>
    %38 = tpu.reciprocal %37 {approx = true} : vector<1x8x1xf32> -> vector<1x8x1xf32>
    %39 = vector.broadcast %38 : vector<1x8x1xf32> to vector<1x8x8xf32>
    %40 = arith.mulf %35, %39 : vector<1x8x8xf32>
    %41 = arith.truncf %40 : vector<1x8x8xf32> to vector<1x8x8xbf16>
    "tpu.trace_start"() <{level = 10 : i32, message = "bqk,bkd->bqd"}> : () -> ()
    %cst_25 = arith.constant dense<0.000000e+00> : vector<1x8x16xf32>
    %42 = tpu.matmul %41, %29, %cst_25 {dimension_numbers = #tpu.dot_dimension_numbers<[2], [1], [1], [2], [0, 0, 0, 1, 1, 2], [0], [0]>} : vector<1x8x8xbf16>, vector<1x8x16xbf16>, vector<1x8x16xf32> -> vector<1x8x16xf32>
    "tpu.trace_stop"() : () -> ()
    %43 = arith.truncf %42 : vector<1x8x16xf32> to vector<1x8x16xbf16>
    %44 = vector.extract_strided_slice %12 {offsets = [0, 0, 16], sizes = [1, 8, 16], strides = [1, 1, 1]} : vector<1x8x32xbf16> to vector<1x8x16xbf16>
    %45 = vector.extract_strided_slice %19 {offsets = [0, 0, 16], sizes = [1, 8, 16], strides = [1, 1, 1]} : vector<1x8x32xbf16> to vector<1x8x16xbf16>
    %46 = vector.extract_strided_slice %26 {offsets = [0, 0, 16], sizes = [1, 8, 16], strides = [1, 1, 1]} : vector<1x8x32xbf16> to vector<1x8x16xbf16>
    "tpu.trace_start"() <{level = 10 : i32, message = "bqd,bkd->bqk"}> : () -> ()
    %cst_26 = arith.constant dense<0.000000e+00> : vector<1x8x8xf32>
    %47 = tpu.matmul %44, %45, %cst_26 {dimension_numbers = #tpu.dot_dimension_numbers<[2], [2], [1], [1], [0, 0, 0, 1, 1, 1], [0], [0]>} : vector<1x8x16xbf16>, vector<1x8x16xbf16>, vector<1x8x8xf32> -> vector<1x8x8xf32>
    "tpu.trace_stop"() : () -> ()
    %cst_27 = arith.constant dense<0xFF800000> : vector<1x8xf32>
    %48 = vector.multi_reduction <maximumf>, %47, %cst_27 [2] : vector<1x8x8xf32> to vector<1x8xf32>
    %49 = vector.shape_cast %48 : vector<1x8xf32> to vector<1x8x1xf32>
    %50 = vector.broadcast %49 : vector<1x8x1xf32> to vector<1x8x8xf32>
    %51 = arith.subf %47, %50 : vector<1x8x8xf32>
    %52 = math.exp %51 : vector<1x8x8xf32>
    %cst_28 = arith.constant dense<0.000000e+00> : vector<1x8xf32>
    %53 = vector.multi_reduction <add>, %52, %cst_28 [2] : vector<1x8x8xf32> to vector<1x8xf32>
    %54 = vector.shape_cast %53 : vector<1x8xf32> to vector<1x8x1xf32>
    %55 = tpu.reciprocal %54 {approx = true} : vector<1x8x1xf32> -> vector<1x8x1xf32>
    %56 = vector.broadcast %55 : vector<1x8x1xf32> to vector<1x8x8xf32>
    %57 = arith.mulf %52, %56 : vector<1x8x8xf32>
    %58 = arith.truncf %57 : vector<1x8x8xf32> to vector<1x8x8xbf16>
    "tpu.trace_start"() <{level = 10 : i32, message = "bqk,bkd->bqd"}> : () -> ()
    %cst_29 = arith.constant dense<0.000000e+00> : vector<1x8x16xf32>
    %59 = tpu.matmul %58, %46, %cst_29 {dimension_numbers = #tpu.dot_dimension_numbers<[2], [1], [1], [2], [0, 0, 0, 1, 1, 2], [0], [0]>} : vector<1x8x8xbf16>, vector<1x8x16xbf16>, vector<1x8x16xf32> -> vector<1x8x16xf32>
    "tpu.trace_stop"() : () -> ()
    %60 = arith.truncf %59 : vector<1x8x16xf32> to vector<1x8x16xbf16>
    %61 = tpu.concatenate %43, %60 in 2 : vector<1x8x16xbf16>, vector<1x8x16xbf16> -> vector<1x8x32xbf16>
    %62 = vector.shape_cast %61 : vector<1x8x32xbf16> to vector<8x32xbf16>
    %c0_30 = arith.constant 0 : index
    %c0_31 = arith.constant 0 : index
    %63 = vector.load %arg10[%c0_30, %c0_31] : memref<32x32xbf16, #tpu.memory_space<vmem>>, vector<32x32xbf16>
    %cst_32 = arith.constant dense<0.000000e+00> : vector<8x32xf32>
    %64 = tpu.matmul %62, %63, %cst_32 {dimension_numbers = #tpu.dot_dimension_numbers<[1], [0], [0], [1], [0, 0, 1, 1], [], []>} : vector<8x32xbf16>, vector<32x32xbf16>, vector<8x32xf32> -> vector<8x32xf32>
    %65 = vector.shape_cast %64 : vector<8x32xf32> to vector<1x8x32xf32>
    %c0_33 = arith.constant 0 : index
    %c0_34 = arith.constant 0 : index
    %66 = vector.load %arg11[%c0_33, %c0_34] : memref<1x32xf32, #tpu.memory_space<vmem>>, vector<1x32xf32>
    %67 = vector.shape_cast %66 : vector<1x32xf32> to vector<1x1x32xf32>
    %68 = vector.broadcast %67 : vector<1x1x32xf32> to vector<1x8x32xf32>
    %69 = arith.addf %65, %68 : vector<1x8x32xf32>
    %c0_35 = arith.constant 0 : index
    %c0_36 = arith.constant 0 : index
    %c0_37 = arith.constant 0 : index
    %70 = vector.load %arg1[%c0_35, %c0_36, %c0_37] : memref<1x8x32xbf16, #tpu.memory_space<vmem>>, vector<1x8x32xbf16>
    %71 = arith.extf %70 : vector<1x8x32xbf16> to vector<1x8x32xf32>
    %72 = arith.addf %69, %71 : vector<1x8x32xf32>
    %cst_38 = arith.constant dense<0.000000e+00> : vector<1x8xf32>
    %73 = vector.multi_reduction <add>, %72, %cst_38 [2] : vector<1x8x32xf32> to vector<1x8xf32>
    %74 = vector.shape_cast %73 : vector<1x8xf32> to vector<1x8x1xf32>
    %cst_39 = arith.constant 3.200000e+01 : f32
    %75 = vector.broadcast %cst_39 : f32 to vector<1x8x1xf32>
    %76 = arith.divf %74, %75 : vector<1x8x1xf32>
    %77 = vector.broadcast %76 : vector<1x8x1xf32> to vector<1x8x32xf32>
    %78 = arith.subf %72, %77 : vector<1x8x32xf32>
    %79 = arith.mulf %78, %78 : vector<1x8x32xf32>
    %cst_40 = arith.constant dense<0.000000e+00> : vector<1x8xf32>
    %80 = vector.multi_reduction <add>, %79, %cst_40 [2] : vector<1x8x32xf32> to vector<1x8xf32>
    %81 = vector.shape_cast %80 : vector<1x8xf32> to vector<1x8x1xf32>
    %cst_41 = arith.constant 3.200000e+01 : f32
    %82 = vector.broadcast %cst_41 : f32 to vector<1x8x1xf32>
    %83 = arith.divf %81, %82 : vector<1x8x1xf32>
    %84 = vector.broadcast %76 : vector<1x8x1xf32> to vector<1x8x32xf32>
    %85 = arith.subf %72, %84 : vector<1x8x32xf32>
    %cst_42 = arith.constant 9.99999974E-6 : f32
    %86 = vector.broadcast %cst_42 : f32 to vector<1x8x1xf32>
    %87 = arith.addf %83, %86 : vector<1x8x1xf32>
    %88 = math.rsqrt %87 : vector<1x8x1xf32>
    %89 = vector.broadcast %88 : vector<1x8x1xf32> to vector<1x8x32xf32>
    %90 = arith.mulf %85, %89 : vector<1x8x32xf32>
    %c0_43 = arith.constant 0 : index
    %c0_44 = arith.constant 0 : index
    %91 = vector.load %arg12[%c0_43, %c0_44] : memref<1x32xf32, #tpu.memory_space<vmem>>, vector<1x32xf32>
    %92 = vector.shape_cast %91 : vector<1x32xf32> to vector<1x1x32xf32>
    %93 = vector.broadcast %92 : vector<1x1x32xf32> to vector<1x8x32xf32>
    %94 = arith.mulf %90, %93 : vector<1x8x32xf32>
    %c0_45 = arith.constant 0 : index
    %c0_46 = arith.constant 0 : index
    %95 = vector.load %arg13[%c0_45, %c0_46] : memref<1x32xf32, #tpu.memory_space<vmem>>, vector<1x32xf32>
    %96 = vector.shape_cast %95 : vector<1x32xf32> to vector<1x1x32xf32>
    %97 = vector.broadcast %96 : vector<1x1x32xf32> to vector<1x8x32xf32>
    %98 = arith.addf %94, %97 : vector<1x8x32xf32>
    %c0_47 = arith.constant 0 : index
    %c0_48 = arith.constant 0 : index
    %c0_49 = arith.constant 0 : index
    %99 = vector.load %arg14[%c0_47, %c0_48, %c0_49] : memref<1x8x32xf32, #tpu.memory_space<vmem>>, vector<1x8x32xf32>
    tpu.vector_store %arg14[%c0_47, %c0_48, %c0_49], %98 {strides = array<i32>} : memref<1x8x32xf32, #tpu.memory_space<vmem>>, vector<1x8x32xf32>,
    return
  }
  func.func @transform_0(%arg0: i32) -> (i32, i32, i32) {
    %c0_i32 = arith.constant 0 : i32
    %c0_i32_0 = arith.constant 0 : i32
    %c0_i32_1 = arith.constant 0 : i32
    return %arg0, %c0_i32, %c0_i32_0 : i32, i32, i32
  }
  func.func @transform_1(%arg0: i32) -> (i32, i32, i32) {
    %c0_i32 = arith.constant 0 : i32
    %c0_i32_0 = arith.constant 0 : i32
    %c0_i32_1 = arith.constant 0 : i32
    return %arg0, %c0_i32, %c0_i32_0 : i32, i32, i32
  }
  func.func @transform_2(%arg0: i32) -> (i32, i32, i32) {
    %c0_i32 = arith.constant 0 : i32
    %c0_i32_0 = arith.constant 0 : i32
    %c0_i32_1 = arith.constant 0 : i32
    return %arg0, %c0_i32, %c0_i32_0 : i32, i32, i32
  }
  func.func @transform_3(%arg0: i32) -> (i32, i32) {
    %c0_i32 = arith.constant 0 : i32
    %c0_i32_0 = arith.constant 0 : i32
    %c0_i32_1 = arith.constant 0 : i32
    return %c0_i32, %c0_i32_0 : i32, i32
  }
  func.func @transform_4(%arg0: i32) -> (i32, i32) {
    %c0_i32 = arith.constant 0 : i32
    %c0_i32_0 = arith.constant 0 : i32
    %c0_i32_1 = arith.constant 0 : i32
    return %c0_i32, %c0_i32_0 : i32, i32
  }
  func.func @transform_5(%arg0: i32) -> (i32, i32) {
    %c0_i32 = arith.constant 0 : i32
    %c0_i32_0 = arith.constant 0 : i32
    %c0_i32_1 = arith.constant 0 : i32
    return %c0_i32, %c0_i32_0 : i32, i32
  }
  func.func @transform_6(%arg0: i32) -> (i32, i32) {
    %c0_i32 = arith.constant 0 : i32
    %c0_i32_0 = arith.constant 0 : i32
    %c0_i32_1 = arith.constant 0 : i32
    return %c0_i32, %c0_i32_0 : i32, i32
  }
  func.func @transform_7(%arg0: i32) -> (i32, i32) {
    %c0_i32 = arith.constant 0 : i32
    %c0_i32_0 = arith.constant 0 : i32
    %c0_i32_1 = arith.constant 0 : i32
    return %c0_i32, %c0_i32_0 : i32, i32
  }
  func.func @transform_8(%arg0: i32) -> (i32, i32) {
    %c0_i32 = arith.constant 0 : i32
    %c0_i32_0 = arith.constant 0 : i32
    %c0_i32_1 = arith.constant 0 : i32
    return %c0_i32, %c0_i32_0 : i32, i32
  }
  func.func @transform_9(%arg0: i32) -> (i32, i32) {
    %c0_i32 = arith.constant 0 : i32
    %c0_i32_0 = arith.constant 0 : i32
    %c0_i32_1 = arith.constant 0 : i32
    return %c0_i32, %c0_i32_0 : i32, i32
  }
  func.func @transform_10(%arg0: i32) -> (i32, i32) {
    %c0_i32 = arith.constant 0 : i32
    %c0_i32_0 = arith.constant 0 : i32
    %c0_i32_1 = arith.constant 0 : i32
    return %c0_i32, %c0_i32_0 : i32, i32
  }
  func.func @transform_11(%arg0: i32) -> (i32, i32) {
    %c0_i32 = arith.constant 0 : i32
    %c0_i32_0 = arith.constant 0 : i32
    %c0_i32_1 = arith.constant 0 : i32
    return %c0_i32, %c0_i32_0 : i32, i32
  }
  func.func @transform_12(%arg0: i32) -> (i32, i32) {
    %c0_i32 = arith.constant 0 : i32
    %c0_i32_0 = arith.constant 0 : i32
    %c0_i32_1 = arith.constant 0 : i32
    return %c0_i32, %c0_i32_0 : i32, i32
  }
  func.func @transform_13(%arg0: i32) -> (i32, i32, i32) {
    %c0_i32 = arith.constant 0 : i32
    %c0_i32_0 = arith.constant 0 : i32
    %c0_i32_1 = arith.constant 0 : i32
    return %arg0, %c0_i32, %c0_i32_0 : i32, i32, i32
  }
}

</mosaic_0001>

<llo_original>
// kernel: tpu_custom_call.1
$region0: #{tpu_custom_call.1}
  #allocation0 [shape = 'u32[]', space=smem, size = 0x4, offset = 0x4, fixed_abs, tag = 'smem constant byte address 0x4 - core index']
  #allocation1 [shape = 'u32[144,128]{1,0:T(1,128)}', space=vmem, size = 0x12000, scoped, tag = 'internal scratch']
  %s0 = inlined_call_operand.hbm [shape: bf16[2,8,32], index: 0, kind: input, shape index: {}]
  %s1 = inlined_call_operand.hbm [shape: bf16[2,8,32], index: 1, kind: input, shape index: {}]
  %s2 = inlined_call_operand.hbm [shape: bf16[2,8,32], index: 2, kind: input, shape index: {}]
  %s3 = inlined_call_operand.hbm [shape: bf16[32,32], index: 3, kind: input, shape index: {}]
  %s4 = inlined_call_operand.hbm [shape: f32[1,32], index: 4, kind: input, shape index: {}]
  %s5 = inlined_call_operand.hbm [shape: bf16[32,32], index: 5, kind: input, shape index: {}]
  %s6 = inlined_call_operand.hbm [shape: f32[1,32], index: 6, kind: input, shape index: {}]
  %s7 = inlined_call_operand.hbm [shape: bf16[32,32], index: 7, kind: input, shape index: {}]
  %s8 = inlined_call_operand.hbm [shape: f32[1,32], index: 8, kind: input, shape index: {}]
  %s9 = inlined_call_operand.vmem [shape: bf16[32,32], index: 9, kind: input, shape index: {}]
  %s10 = inlined_call_operand.vmem [shape: f32[1,32], index: 10, kind: input, shape index: {}]
  %s11 = inlined_call_operand.vmem [shape: f32[1,32], index: 11, kind: input, shape index: {}]
  %s12 = inlined_call_operand.vmem [shape: f32[1,32], index: 12, kind: input, shape index: {}]
  %s13 = inlined_call_operand.hbm [shape: f32[2,8,32], index: 13, kind: output, shape index: {}]
  %s14 = sld [smem:[#allocation0]]
  $region121: #{tpu_custom_call.1} parent=0
    _
  %s16 = ssub.s32 1, %s14
  %s17 = scalar_select 0, %s16, %s14
  $region1: #{tpu_custom_call.1} parent=0
    #allocation2 [shape = 'u8[4096]{0}', space=vmem, size = 0x1000, scoped, tag = 'input window, operand 0']
    #allocation3 [shape = 's32[2]{0}', space=sflag, size = 0x8, scoped, tag = 'scoped memory for tpu_custom_call.1']
    #allocation4 [shape = 's32[2]{0}', space=sflag, size = 0x8, scoped, tag = 'scoped memory for tpu_custom_call.1']
    #allocation5 [shape = 'u8[4096]{0}', space=vmem, size = 0x1000, scoped, tag = 'input window, operand 1']
    #allocation6 [shape = 's32[2]{0}', space=sflag, size = 0x8, scoped, tag = 'scoped memory for tpu_custom_call.1']
    #allocation7 [shape = 'u8[4096]{0}', space=vmem, size = 0x1000, scoped, tag = 'input window, operand 2']
    #allocation8 [shape = 'u8[8192]{0}', space=vmem, size = 0x2000, scoped, tag = 'input window, operand 3, single buffered']
    #allocation9 [shape = 's32[1]{0}', space=sflag, size = 0x4, scoped, tag = 'scoped memory for tpu_custom_call.1']
    #allocation10 [shape = 'u8[512]{0}', space=vmem, size = 0x400, scoped, tag = 'input window, operand 4, single buffered']
    #allocation11 [shape = 'u8[8192]{0}', space=vmem, size = 0x2000, scoped, tag = 'input window, operand 5, single buffered']
    #allocation12 [shape = 's32[1]{0}', space=sflag, size = 0x4, scoped, tag = 'scoped memory for tpu_custom_call.1']
    #allocation13 [shape = 'u8[512]{0}', space=vmem, size = 0x400, scoped, tag = 'input window, operand 6, single buffered']
    #allocation14 [shape = 'u8[8192]{0}', space=vmem, size = 0x2000, scoped, tag = 'input window, operand 7, single buffered']
    #allocation15 [shape = 's32[1]{0}', space=sflag, size = 0x4, scoped, tag = 'scoped memory for tpu_custom_call.1']
    #allocation16 [shape = 'u8[512]{0}', space=vmem, size = 0x400, scoped, tag = 'input window, operand 8, single buffered']
    #allocation17 [shape = 'u8[8192]{0}', space=vmem, size = 0x2000, scoped, tag = 'output window, operand 0']
    %18 = vsyncpa [#allocation3], 0
    %s19 = scalar_lea.sflag [#allocation3], 1
    %20 = vsyncpa %s19, 0
    %21 = vsyncpa [#allocation6], 0
    %s22 = scalar_lea.sflag [#allocation6], 1
    %23 = vsyncpa %s22, 0
    %24 = vsyncpa [#allocation9], 0
    %25 = vsyncpa [#allocation12], 0
    %26 = vsyncpa [#allocation15], 0
    %27 = vsyncpa [#allocation4], 0
    %s28 = scalar_lea.sflag [#allocation4], 1
    %29 = vsyncpa %s28, 0
    loop: start=0, step=1, limit=4
    $region2: #{tpu_custom_call.1} parent=1 // loop_pre_header
      _
    $region3: #{tpu_custom_call.1} parent=1 // loop_header
      %s31 = sphi 0, %s35
      %p32 = scmp.ge.s32.totalorder %s31, 4
      %s41 = sphi 0, %s43
      %s44 = sphi 0, %s41
      %s45 = sphi 0, %s44
      %s61 = sphi 0, %s45
      %s67 = sphi 0, %s69
      %s70 = sphi 0, %s67
      %s71 = sphi 0, %s70
      %s87 = sphi 0, %s71
      %s93 = sphi 0, %s95
      %s96 = sphi 0, %s93
      %s97 = sphi 0, %s96
      %s113 = sphi 0, %s97
      %s117 = sphi 0, %s117
      %s119 = sphi 0, %s117
      %s120 = sphi 0, %s119
      %s134 = sphi 0, %s120
      %s138 = sphi 0, %s138
      %s140 = sphi 0, %s138
      %s141 = sphi 0, %s140
      %s155 = sphi 0, %s141
      %s159 = sphi 0, %s159
      %s161 = sphi 0, %s159
      %s162 = sphi 0, %s161
      %s176 = sphi 0, %s162
      %s180 = sphi 0, %s180
      %s182 = sphi 0, %s180
      %s183 = sphi 0, %s182
      %s197 = sphi 0, %s183
      %s201 = sphi 0, %s201
      %s203 = sphi 0, %s201
      %s204 = sphi 0, %s203
      %s218 = sphi 0, %s204
      %s222 = sphi 0, %s222
      %s224 = sphi 0, %s222
      %s225 = sphi 0, %s224
      %s239 = sphi 0, %s225
      %s243 = sphi 0, %s243
      %s245 = sphi 0, %s243
      %s246 = sphi 0, %s245
      %s260 = sphi 0, %s246
      %s264 = sphi 0, %s264
      %s266 = sphi 0, %s264
      %s267 = sphi 0, %s266
      %s281 = sphi 0, %s267
      %s285 = sphi 0, %s285
      %s287 = sphi 0, %s285
      %s288 = sphi 0, %s287
      %s302 = sphi 0, %s288
      %s306 = sphi 0, %s306
      %s308 = sphi 0, %s306
      %s309 = sphi 0, %s308
      %s323 = sphi 0, %s309
      %s329 = sphi 0, %s331
      %s332 = sphi 0, %s329
      %s333 = sphi 0, %s332
      %s349 = sphi 0, %s333
    $region4: #{tpu_custom_call.1} parent=1 // loop_header_branch
      %34 = sbr.rel (%p32) target = $region8
    $region5: #{tpu_custom_call.1} parent=1 // loop_body
      %s36 = ssub.s32 %s31, 1
      %s37 = ssub.s32 %s31, 2
      %s38 = sadd.s32 %s31, 1
      %s39 = ssub.s32 %s31, %s38
      %p40 = scmp.eq.s32.totalorder %s39, 0
      %s42 = sadd.s32 %s41, 1
      %s43 = scalar_select %p40, %s41, %s42
      %p46 = pneg %p40
      %p47 = scmp.eq.s32.totalorder %s31, 1
      %p48 = por %p46, %p47
      %p49 = scmp.ne.s32.totalorder %s41, %s44
      %p50 = scmp.eq.s32.totalorder %s31, 0
      %p51 = por %p49, %p50
      %p52 = scmp.ne.s32.totalorder %s41, %s44
      %p53 = scmp.eq.s32.totalorder %s36, 1
      %p54 = por %p52, %p53
      %p55 = scmp.ne.s32.totalorder %s44, %s45
      %p56 = scmp.eq.s32.totalorder %s36, 0
      %p57 = por %p55, %p56
      %p58 = scmp.ne.s32.totalorder %s44, %s45
      %p59 = scmp.eq.s32.totalorder %s37, 1
      %p60 = por %p58, %p59
      %p62 = scmp.ne.s32.totalorder %s45, %s61
      %p63 = scmp.eq.s32.totalorder %s37, 0
      %p64 = por %p62, %p63
      %s65 = ssub.s32 %s31, %s38
      %p66 = scmp.eq.s32.totalorder %s65, 0
      %s68 = sadd.s32 %s67, 1
      %s69 = scalar_select %p66, %s67, %s68
      %p72 = pneg %p66
      %p73 = scmp.eq.s32.totalorder %s31, 1
      %p74 = por %p72, %p73
      %p75 = scmp.ne.s32.totalorder %s67, %s70
      %p76 = scmp.eq.s32.totalorder %s31, 0
      %p77 = por %p75, %p76
      %p78 = scmp.ne.s32.totalorder %s67, %s70
      %p79 = scmp.eq.s32.totalorder %s36, 1
      %p80 = por %p78, %p79
      %p81 = scmp.ne.s32.totalorder %s70, %s71
      %p82 = scmp.eq.s32.totalorder %s36, 0
      %p83 = por %p81, %p82
      %p84 = scmp.ne.s32.totalorder %s70, %s71
      %p85 = scmp.eq.s32.totalorder %s37, 1
      %p86 = por %p84, %p85
      %p88 = scmp.ne.s32.totalorder %s71, %s87
      %p89 = scmp.eq.s32.totalorder %s37, 0
      %p90 = por %p88, %p89
      %s91 = ssub.s32 %s31, %s38
      %p92 = scmp.eq.s32.totalorder %s91, 0
      %s94 = sadd.s32 %s93, 1
      %s95 = scalar_select %p92, %s93, %s94
      %p98 = pneg %p92
      %p99 = scmp.eq.s32.totalorder %s31, 1
      %p100 = por %p98, %p99
      %p101 = scmp.ne.s32.totalorder %s93, %s96
      %p102 = scmp.eq.s32.totalorder %s31, 0
      %p103 = por %p101, %p102
      %p104 = scmp.ne.s32.totalorder %s93, %s96
      %p105 = scmp.eq.s32.totalorder %s36, 1
      %p106 = por %p104, %p105
      %p107 = scmp.ne.s32.totalorder %s96, %s97
      %p108 = scmp.eq.s32.totalorder %s36, 0
      %p109 = por %p107, %p108
      %p110 = scmp.ne.s32.totalorder %s96, %s97
      %p111 = scmp.eq.s32.totalorder %s37, 1
      %p112 = por %p110, %p111
      %p114 = scmp.ne.s32.totalorder %s97, %s113
      %p115 = scmp.eq.s32.totalorder %s37, 0
      %p116 = por %p114, %p115
      %s118 = sadd.s32 %s117, 1
      %p121 = scmp.eq.s32.totalorder %s31, 1
      %p122 = scmp.ne.s32.totalorder %s117, %s119
      %p123 = scmp.eq.s32.totalorder %s31, 0
      %p124 = por %p122, %p123
      %p125 = scmp.ne.s32.totalorder %s117, %s119
      %p126 = scmp.eq.s32.totalorder %s36, 1
      %p127 = por %p125, %p126
      %p128 = scmp.ne.s32.totalorder %s119, %s120
      %p129 = scmp.eq.s32.totalorder %s36, 0
      %p130 = por %p128, %p129
      %p131 = scmp.ne.s32.totalorder %s119, %s120
      %p132 = scmp.eq.s32.totalorder %s37, 1
      %p133 = por %p131, %p132
      %p135 = scmp.ne.s32.totalorder %s120, %s134
      %p136 = scmp.eq.s32.totalorder %s37, 0
      %p137 = por %p135, %p136
      %s139 = sadd.s32 %s138, 1
      %p142 = scmp.eq.s32.totalorder %s31, 1
      %p143 = scmp.ne.s32.totalorder %s138, %s140
      %p144 = scmp.eq.s32.totalorder %s31, 0
      %p145 = por %p143, %p144
      %p146 = scmp.ne.s32.totalorder %s138, %s140
      %p147 = scmp.eq.s32.totalorder %s36, 1
      %p148 = por %p146, %p147
      %p149 = scmp.ne.s32.totalorder %s140, %s141
      %p150 = scmp.eq.s32.totalorder %s36, 0
      %p151 = por %p149, %p150
      %p152 = scmp.ne.s32.totalorder %s140, %s141
      %p153 = scmp.eq.s32.totalorder %s37, 1
      %p154 = por %p152, %p153
      %p156 = scmp.ne.s32.totalorder %s141, %s155
      %p157 = scmp.eq.s32.totalorder %s37, 0
      %p158 = por %p156, %p157
      %s160 = sadd.s32 %s159, 1
      %p163 = scmp.eq.s32.totalorder %s31, 1
      %p164 = scmp.ne.s32.totalorder %s159, %s161
      %p165 = scmp.eq.s32.totalorder %s31, 0
      %p166 = por %p164, %p165
      %p167 = scmp.ne.s32.totalorder %s159, %s161
      %p168 = scmp.eq.s32.totalorder %s36, 1
      %p169 = por %p167, %p168
      %p170 = scmp.ne.s32.totalorder %s161, %s162
      %p171 = scmp.eq.s32.totalorder %s36, 0
      %p172 = por %p170, %p171
      %p173 = scmp.ne.s32.totalorder %s161, %s162
      %p174 = scmp.eq.s32.totalorder %s37, 1
      %p175 = por %p173, %p174
      %p177 = scmp.ne.s32.totalorder %s162, %s176
      %p178 = scmp.eq.s32.totalorder %s37, 0
      %p179 = por %p177, %p178
      %s181 = sadd.s32 %s180, 1
      %p184 = scmp.eq.s32.totalorder %s31, 1
      %p185 = scmp.ne.s32.totalorder %s180, %s182
      %p186 = scmp.eq.s32.totalorder %s31, 0
      %p187 = por %p185, %p186
      %p188 = scmp.ne.s32.totalorder %s180, %s182
      %p189 = scmp.eq.s32.totalorder %s36, 1
      %p190 = por %p188, %p189
      %p191 = scmp.ne.s32.totalorder %s182, %s183
      %p192 = scmp.eq.s32.totalorder %s36, 0
      %p193 = por %p191, %p192
      %p194 = scmp.ne.s32.totalorder %s182, %s183
      %p195 = scmp.eq.s32.totalorder %s37, 1
      %p196 = por %p194, %p195
      %p198 = scmp.ne.s32.totalorder %s183, %s197
      %p199 = scmp.eq.s32.totalorder %s37, 0
      %p200 = por %p198, %p199
      %s202 = sadd.s32 %s201, 1
      %p205 = scmp.eq.s32.totalorder %s31, 1
      %p206 = scmp.ne.s32.totalorder %s201, %s203
      %p207 = scmp.eq.s32.totalorder %s31, 0
      %p208 = por %p206, %p207
      %p209 = scmp.ne.s32.totalorder %s201, %s203
      %p210 = scmp.eq.s32.totalorder %s36, 1
      %p211 = por %p209, %p210
      %p212 = scmp.ne.s32.totalorder %s203, %s204
      %p213 = scmp.eq.s32.totalorder %s36, 0
      %p214 = por %p212, %p213
      %p215 = scmp.ne.s32.totalorder %s203, %s204
      %p216 = scmp.eq.s32.totalorder %s37, 1
      %p217 = por %p215, %p216
      %p219 = scmp.ne.s32.totalorder %s204, %s218
      %p220 = scmp.eq.s32.totalorder %s37, 0
      %p221 = por %p219, %p220
      %s223 = sadd.s32 %s222, 1
      %p226 = scmp.eq.s32.totalorder %s31, 1
      %p227 = scmp.ne.s32.totalorder %s222, %s224
      %p228 = scmp.eq.s32.totalorder %s31, 0
      %p229 = por %p227, %p228
      %p230 = scmp.ne.s32.totalorder %s222, %s224
      %p231 = scmp.eq.s32.totalorder %s36, 1
      %p232 = por %p230, %p231
      %p233 = scmp.ne.s32.totalorder %s224, %s225
      %p234 = scmp.eq.s32.totalorder %s36, 0
      %p235 = por %p233, %p234
      %p236 = scmp.ne.s32.totalorder %s224, %s225
      %p237 = scmp.eq.s32.totalorder %s37, 1
      %p238 = por %p236, %p237
      %p240 = scmp.ne.s32.totalorder %s225, %s239
      %p241 = scmp.eq.s32.totalorder %s37, 0
      %p242 = por %p240, %p241
      %s244 = sadd.s32 %s243, 1
      %p247 = scmp.eq.s32.totalorder %s31, 1
      %p248 = scmp.ne.s32.totalorder %s243, %s245
      %p249 = scmp.eq.s32.totalorder %s31, 0
      %p250 = por %p248, %p249
      %p251 = scmp.ne.s32.totalorder %s243, %s245
      %p252 = scmp.eq.s32.totalorder %s36, 1
      %p253 = por %p251, %p252
      %p254 = scmp.ne.s32.totalorder %s245, %s246
      %p255 = scmp.eq.s32.totalorder %s36, 0
      %p256 = por %p254, %p255
      %p257 = scmp.ne.s32.totalorder %s245, %s246
      %p258 = scmp.eq.s32.totalorder %s37, 1
      %p259 = por %p257, %p258
      %p261 = scmp.ne.s32.totalorder %s246, %s260
      %p262 = scmp.eq.s32.totalorder %s37, 0
      %p263 = por %p261, %p262
      %s265 = sadd.s32 %s264, 1
      %p268 = scmp.eq.s32.totalorder %s31, 1
      %p269 = scmp.ne.s32.totalorder %s264, %s266
      %p270 = scmp.eq.s32.totalorder %s31, 0
      %p271 = por %p269, %p270
      %p272 = scmp.ne.s32.totalorder %s264, %s266
      %p273 = scmp.eq.s32.totalorder %s36, 1
      %p274 = por %p272, %p273
      %p275 = scmp.ne.s32.totalorder %s266, %s267
      %p276 = scmp.eq.s32.totalorder %s36, 0
      %p277 = por %p275, %p276
      %p278 = scmp.ne.s32.totalorder %s266, %s267
      %p279 = scmp.eq.s32.totalorder %s37, 1
      %p280 = por %p278, %p279
      %p282 = scmp.ne.s32.totalorder %s267, %s281
      %p283 = scmp.eq.s32.totalorder %s37, 0
      %p284 = por %p282, %p283
      %s286 = sadd.s32 %s285, 1
      %p289 = scmp.eq.s32.totalorder %s31, 1
      %p290 = scmp.ne.s32.totalorder %s285, %s287
      %p291 = scmp.eq.s32.totalorder %s31, 0
      %p292 = por %p290, %p291
      %p293 = scmp.ne.s32.totalorder %s285, %s287
      %p294 = scmp.eq.s32.totalorder %s36, 1
      %p295 = por %p293, %p294
      %p296 = scmp.ne.s32.totalorder %s287, %s288
      %p297 = scmp.eq.s32.totalorder %s36, 0
      %p298 = por %p296, %p297
      %p299 = scmp.ne.s32.totalorder %s287, %s288
      %p300 = scmp.eq.s32.totalorder %s37, 1
      %p301 = por %p299, %p300
      %p303 = scmp.ne.s32.totalorder %s288, %s302
      %p304 = scmp.eq.s32.totalorder %s37, 0
      %p305 = por %p303, %p304
      %s307 = sadd.s32 %s306, 1
      %p310 = scmp.eq.s32.totalorder %s31, 1
      %p311 = scmp.ne.s32.totalorder %s306, %s308
      %p312 = scmp.eq.s32.totalorder %s31, 0
      %p313 = por %p311, %p312
      %p314 = scmp.ne.s32.totalorder %s306, %s308
      %p315 = scmp.eq.s32.totalorder %s36, 1
      %p316 = por %p314, %p315
      %p317 = scmp.ne.s32.totalorder %s308, %s309
      %p318 = scmp.eq.s32.totalorder %s36, 0
      %p319 = por %p317, %p318
      %p320 = scmp.ne.s32.totalorder %s308, %s309
      %p321 = scmp.eq.s32.totalorder %s37, 1
      %p322 = por %p320, %p321
      %p324 = scmp.ne.s32.totalorder %s309, %s323
      %p325 = scmp.eq.s32.totalorder %s37, 0
      %p326 = por %p324, %p325
      %s327 = ssub.s32 %s31, %s38
      %p328 = scmp.eq.s32.totalorder %s327, 0
      %s330 = sadd.s32 %s329, 1
      %s331 = scalar_select %p328, %s329, %s330
      %p334 = pneg %p328
      %p335 = scmp.eq.s32.totalorder %s31, 1
      %p336 = por %p334, %p335
      %p337 = scmp.ne.s32.totalorder %s329, %s332
      %p338 = scmp.eq.s32.totalorder %s31, 0
      %p339 = por %p337, %p338
      %p340 = scmp.ne.s32.totalorder %s329, %s332
      %p341 = scmp.eq.s32.totalorder %s36, 1
      %p342 = por %p340, %p341
      %p343 = scmp.ne.s32.totalorder %s332, %s333
      %p344 = scmp.eq.s32.totalorder %s36, 0
      %p345 = por %p343, %p344
      %p346 = scmp.ne.s32.totalorder %s332, %s333
      %p347 = scmp.eq.s32.totalorder %s37, 1
      %p348 = por %p346, %p347
      %p350 = scmp.ne.s32.totalorder %s333, %s349
      %p351 = scmp.eq.s32.totalorder %s37, 0
      %p352 = por %p350, %p351
      %p353 = scmp.le.s32.totalorder 1, %s31
      %p354 = scmp.lt.s32.totalorder %s31, 3
      %p355 = pnand %p353, %p354
      %p356 = pneg %p355
      // Predicated region
      $region9: #{tpu_custom_call.1} parent=5 // pred_check
        _
      $region10: #{tpu_custom_call.1} parent=5 // pred_check_branch
        %358 = sbr.rel (%p355) target = $region12
      $region11: #{tpu_custom_call.1} parent=5 // pred_region
        %s359 = ssub.s32 %s31, 1
        // Predicated region
        $region13: #{tpu_custom_call.1} parent=11 // pred_check
          %p360 = pneg %p130
        $region14: #{tpu_custom_call.1} parent=11 // pred_check_branch
          %362 = sbr.rel (%p360) target = $region16
        $region15: #{tpu_custom_call.1} parent=11 // pred_region
          %s364 = ssub.s32 256, 256
          %365 = vsyncadd [#allocation9], %s364
          %s366 = sshll.u32 [#allocation8], 4
          %s367 = int_to_ptr.vmem [resolvable:$true] %s366
          %372 = dma.hbm_to_vmem [thread:$0]  %s3, 256, %s367, [#allocation9], 64, 64, 4
        $region16: #{tpu_custom_call.1} parent=11 // pred_fallthru
          _
        // Predicated region
        $region17: #{tpu_custom_call.1} parent=11 // pred_check
          %p373 = pneg %p151
        $region18: #{tpu_custom_call.1} parent=11 // pred_check_branch
          %375 = sbr.rel (%p373) target = $region20
        $region19: #{tpu_custom_call.1} parent=11 // pred_region
          %s377 = ssub.s32 16, 16
          %378 = vsyncadd [#allocation9], %s377
          %s380 = sshll.u32 [#allocation10], 4
          %s381 = int_to_ptr.vmem [resolvable:$true] %s380
          %383 = dma.hbm_to_vmem [thread:$0]  %s4, 16, %s381, [#allocation9]
        $region20: #{tpu_custom_call.1} parent=11 // pred_fallthru
          _
        // Predicated region
        $region21: #{tpu_custom_call.1} parent=11 // pred_check
          %p384 = pneg %p172
        $region22: #{tpu_custom_call.1} parent=11 // pred_check_branch
          %386 = sbr.rel (%p384) target = $region24
        $region23: #{tpu_custom_call.1} parent=11 // pred_region
          %s388 = ssub.s32 256, 256
          %389 = vsyncadd [#allocation12], %s388
          %s390 = sshll.u32 [#allocation11], 4
          %s391 = int_to_ptr.vmem [resolvable:$true] %s390
          %396 = dma.hbm_to_vmem [thread:$0]  %s5, 256, %s391, [#allocation12], 64, 64, 4
        $region24: #{tpu_custom_call.1} parent=11 // pred_fallthru
          _
        // Predicated region
        $region25: #{tpu_custom_call.1} parent=11 // pred_check
          %p397 = pneg %p193
        $region26: #{tpu_custom_call.1} parent=11 // pred_check_branch
          %399 = sbr.rel (%p397) target = $region28
        $region27: #{tpu_custom_call.1} parent=11 // pred_region
          %s401 = ssub.s32 16, 16
          %402 = vsyncadd [#allocation12], %s401
          %s404 = sshll.u32 [#allocation13], 4
          %s405 = int_to_ptr.vmem [resolvable:$true] %s404
          %407 = dma.hbm_to_vmem [thread:$0]  %s6, 16, %s405, [#allocation12]
        $region28: #{tpu_custom_call.1} parent=11 // pred_fallthru
          _
        // Predicated region
        $region29: #{tpu_custom_call.1} parent=11 // pred_check
          %p408 = pneg %p214
        $region30: #{tpu_custom_call.1} parent=11 // pred_check_branch
          %410 = sbr.rel (%p408) target = $region32
        $region31: #{tpu_custom_call.1} parent=11 // pred_region
          %s412 = ssub.s32 256, 256
          %413 = vsyncadd [#allocation15], %s412
          %s414 = sshll.u32 [#allocation14], 4
          %s415 = int_to_ptr.vmem [resolvable:$true] %s414
          %420 = dma.hbm_to_vmem [thread:$0]  %s7, 256, %s415, [#allocation15], 64, 64, 4
        $region32: #{tpu_custom_call.1} parent=11 // pred_fallthru
          _
        // Predicated region
        $region33: #{tpu_custom_call.1} parent=11 // pred_check
          %p421 = pneg %p235
        $region34: #{tpu_custom_call.1} parent=11 // pred_check_branch
          %423 = sbr.rel (%p421) target = $region36
        $region35: #{tpu_custom_call.1} parent=11 // pred_region
          %s425 = ssub.s32 16, 16
          %426 = vsyncadd [#allocation15], %s425
          %s428 = sshll.u32 [#allocation16], 4
          %s429 = int_to_ptr.vmem [resolvable:$true] %s428
          %431 = dma.hbm_to_vmem [thread:$0]  %s8, 16, %s429, [#allocation15]
        $region36: #{tpu_custom_call.1} parent=11 // pred_fallthru
          _
        // Predicated region
        $region37: #{tpu_custom_call.1} parent=11 // pred_check
          %p432 = pneg %p256
        $region38: #{tpu_custom_call.1} parent=11 // pred_check_branch
          %434 = sbr.rel (%p432) target = $region40
        $region39: #{tpu_custom_call.1} parent=11 // pred_region
          _
        $region40: #{tpu_custom_call.1} parent=11 // pred_fallthru
          _
        // Predicated region
        $region41: #{tpu_custom_call.1} parent=11 // pred_check
          %p435 = pneg %p277
        $region42: #{tpu_custom_call.1} parent=11 // pred_check_branch
          %437 = sbr.rel (%p435) target = $region44
        $region43: #{tpu_custom_call.1} parent=11 // pred_region
          _
        $region44: #{tpu_custom_call.1} parent=11 // pred_fallthru
          _
        // Predicated region
        $region45: #{tpu_custom_call.1} parent=11 // pred_check
          %p438 = pneg %p298
        $region46: #{tpu_custom_call.1} parent=11 // pred_check_branch
          %440 = sbr.rel (%p438) target = $region48
        $region47: #{tpu_custom_call.1} parent=11 // pred_region
          _
        $region48: #{tpu_custom_call.1} parent=11 // pred_fallthru
          _
        // Predicated region
        $region49: #{tpu_custom_call.1} parent=11 // pred_check
          %p441 = pneg %p319
        $region50: #{tpu_custom_call.1} parent=11 // pred_check_branch
          %443 = sbr.rel (%p441) target = $region52
        $region51: #{tpu_custom_call.1} parent=11 // pred_region
          _
        $region52: #{tpu_custom_call.1} parent=11 // pred_fallthru
          _
      $region12: #{tpu_custom_call.1} parent=5 // pred_fallthru
        _
      %p444 = scmp.lt.s32.totalorder %s31, 2
      // Predicated region
      $region53: #{tpu_custom_call.1} parent=5 // pred_check
        %p445 = pneg %p444
      $region54: #{tpu_custom_call.1} parent=5 // pred_check_branch
        %447 = sbr.rel (%p445) target = $region56
      $region55: #{tpu_custom_call.1} parent=5 // pred_region
        // Predicated region
        $region57: #{tpu_custom_call.1} parent=55 // pred_check
          %p448 = pneg %p51
        $region58: #{tpu_custom_call.1} parent=55 // pred_check_branch
          %450 = sbr.rel (%p448) target = $region60
        $region59: #{tpu_custom_call.1} parent=55 // pred_region
          %s451 = sand.u32 %s41, 1
          %s452 = scalar_lea.sflag [#allocation3], %s451
          %s453 = sand.u32 %s41, 1
          %s454 = smul.addr %s453, 4
          %s455 = scalar_lea.vmem [#allocation2], %s454
          %s457 = ssub.s32 64, 64
          %458 = vsyncadd %s452, %s457
          %s459 = smul.addr %s31, 64
          %s460 = scalar_lea.hbm %s0, %s459
          %s462 = sshll.u32 %s455, 4
          %s463 = int_to_ptr.vmem [resolvable:$true] %s462
          %465 = dma.hbm_to_vmem [thread:$0]  %s460, 64, %s463, %s452
        $region60: #{tpu_custom_call.1} parent=55 // pred_fallthru
          _
        // Predicated region
        $region61: #{tpu_custom_call.1} parent=55 // pred_check
          %p466 = pneg %p77
        $region62: #{tpu_custom_call.1} parent=55 // pred_check_branch
          %468 = sbr.rel (%p466) target = $region64
        $region63: #{tpu_custom_call.1} parent=55 // pred_region
          %s469 = sand.u32 %s31, 1
          %s470 = scalar_lea.sflag [#allocation6], %s469
          %s471 = sand.u32 %s67, 1
          %s472 = smul.addr %s471, 4
          %s473 = scalar_lea.vmem [#allocation5], %s472
          %s475 = ssub.s32 64, 64
          %476 = vsyncadd %s470, %s475
          %s477 = smul.addr %s31, 64
          %s478 = scalar_lea.hbm %s1, %s477
          %s480 = sshll.u32 %s473, 4
          %s481 = int_to_ptr.vmem [resolvable:$true] %s480
          %483 = dma.hbm_to_vmem [thread:$0]  %s478, 64, %s481, %s470
        $region64: #{tpu_custom_call.1} parent=55 // pred_fallthru
          _
        // Predicated region
        $region65: #{tpu_custom_call.1} parent=55 // pred_check
          %p484 = pneg %p103
        $region66: #{tpu_custom_call.1} parent=55 // pred_check_branch
          %486 = sbr.rel (%p484) target = $region68
        $region67: #{tpu_custom_call.1} parent=55 // pred_region
          %s487 = sand.u32 %s31, 1
          %s488 = scalar_lea.sflag [#allocation6], %s487
          %s489 = sand.u32 %s93, 1
          %s490 = smul.addr %s489, 4
          %s491 = scalar_lea.vmem [#allocation7], %s490
          %s493 = ssub.s32 64, 64
          %494 = vsyncadd %s488, %s493
          %s495 = smul.addr %s31, 64
          %s496 = scalar_lea.hbm %s2, %s495
          %s498 = sshll.u32 %s491, 4
          %s499 = int_to_ptr.vmem [resolvable:$true] %s498
          %501 = dma.hbm_to_vmem [thread:$0]  %s496, 64, %s499, %s488
        $region68: #{tpu_custom_call.1} parent=55 // pred_fallthru
          _
      $region56: #{tpu_custom_call.1} parent=5 // pred_fallthru
        _
      %p502 = scmp.le.s32.totalorder 1, %s31
      %p503 = scmp.lt.s32.totalorder %s31, 3
      %p504 = pnand %p502, %p503
      %p505 = pneg %p504
      // Predicated region
      $region69: #{tpu_custom_call.1} parent=5 // pred_check
        _
      $region70: #{tpu_custom_call.1} parent=5 // pred_check_branch
        %507 = sbr.rel (%p504) target = $region72
      $region71: #{tpu_custom_call.1} parent=5 // pred_region
        %s508 = ssub.s32 %s31, 1
        %s509 = sand.u32 %s44, 1
        %s510 = scalar_lea.sflag [#allocation3], %s509
        %s511 = sand.u32 %s44, 1
        %s512 = smul.addr %s511, 4
        %s513 = scalar_lea.vmem [#allocation2], %s512
        // Predicated region
        $region73: #{tpu_custom_call.1} parent=71 // pred_check
          %p514 = pneg %p57
        $region74: #{tpu_custom_call.1} parent=71 // pred_check_branch
          %516 = sbr.rel (%p514) target = $region76
        $region75: #{tpu_custom_call.1} parent=71 // pred_region
          %517 = dma.done %s510, 64
        $region76: #{tpu_custom_call.1} parent=71 // pred_fallthru
          _
        %s518 = sand.u32 %s36, 1
        %s519 = scalar_lea.sflag [#allocation6], %s518
        %s520 = sand.u32 %s70, 1
        %s521 = smul.addr %s520, 4
        %s522 = scalar_lea.vmem [#allocation5], %s521
        // Predicated region
        $region77: #{tpu_custom_call.1} parent=71 // pred_check
          %p523 = pneg %p83
        $region78: #{tpu_custom_call.1} parent=71 // pred_check_branch
          %525 = sbr.rel (%p523) target = $region80
        $region79: #{tpu_custom_call.1} parent=71 // pred_region
          %526 = dma.done %s519, 64
        $region80: #{tpu_custom_call.1} parent=71 // pred_fallthru
          _
        %s527 = sand.u32 %s36, 1
        %s528 = scalar_lea.sflag [#allocation6], %s527
        %s529 = sand.u32 %s96, 1
        %s530 = smul.addr %s529, 4
        %s531 = scalar_lea.vmem [#allocation7], %s530
        // Predicated region
        $region81: #{tpu_custom_call.1} parent=71 // pred_check
          %p532 = pneg %p109
        $region82: #{tpu_custom_call.1} parent=71 // pred_check_branch
          %534 = sbr.rel (%p532) target = $region84
        $region83: #{tpu_custom_call.1} parent=71 // pred_region
          %535 = dma.done %s528, 64
        $region84: #{tpu_custom_call.1} parent=71 // pred_fallthru
          _
        // Predicated region
        $region85: #{tpu_custom_call.1} parent=71 // pred_check
          %p536 = pneg %p130
        $region86: #{tpu_custom_call.1} parent=71 // pred_check_branch
          %538 = sbr.rel (%p536) target = $region88
        $region87: #{tpu_custom_call.1} parent=71 // pred_region
          %539 = dma.done [#allocation9], 256
        $region88: #{tpu_custom_call.1} parent=71 // pred_fallthru
          _
        // Predicated region
        $region89: #{tpu_custom_call.1} parent=71 // pred_check
          %p540 = pneg %p151
        $region90: #{tpu_custom_call.1} parent=71 // pred_check_branch
          %542 = sbr.rel (%p540) target = $region92
        $region91: #{tpu_custom_call.1} parent=71 // pred_region
          %543 = dma.done [#allocation9], 16
        $region92: #{tpu_custom_call.1} parent=71 // pred_fallthru
          _
        // Predicated region
        $region93: #{tpu_custom_call.1} parent=71 // pred_check
          %p544 = pneg %p172
        $region94: #{tpu_custom_call.1} parent=71 // pred_check_branch
          %546 = sbr.rel (%p544) target = $region96
        $region95: #{tpu_custom_call.1} parent=71 // pred_region
          %547 = dma.done [#allocation12], 256
        $region96: #{tpu_custom_call.1} parent=71 // pred_fallthru
          _
        // Predicated region
        $region97: #{tpu_custom_call.1} parent=71 // pred_check
          %p548 = pneg %p193
        $region98: #{tpu_custom_call.1} parent=71 // pred_check_branch
          %550 = sbr.rel (%p548) target = $region100
        $region99: #{tpu_custom_call.1} parent=71 // pred_region
          %551 = dma.done [#allocation12], 16
        $region100: #{tpu_custom_call.1} parent=71 // pred_fallthru
          _
        // Predicated region
        $region101: #{tpu_custom_call.1} parent=71 // pred_check
          %p552 = pneg %p214
        $region102: #{tpu_custom_call.1} parent=71 // pred_check_branch
          %554 = sbr.rel (%p552) target = $region104
        $region103: #{tpu_custom_call.1} parent=71 // pred_region
          %555 = dma.done [#allocation15], 256
        $region104: #{tpu_custom_call.1} parent=71 // pred_fallthru
          _
        // Predicated region
        $region105: #{tpu_custom_call.1} parent=71 // pred_check
          %p556 = pneg %p235
        $region106: #{tpu_custom_call.1} parent=71 // pred_check_branch
          %558 = sbr.rel (%p556) target = $region108
        $region107: #{tpu_custom_call.1} parent=71 // pred_region
          %559 = dma.done [#allocation15], 16
        $region108: #{tpu_custom_call.1} parent=71 // pred_fallthru
          _
        %s560 = sand.u32 %s44, 1
        %s561 = scalar_lea.sflag [#allocation3], %s560
        %s562 = sand.u32 %s44, 1
        %s563 = smul.addr %s562, 4
        %s564 = scalar_lea.vmem [#allocation2], %s563
        %p565 = pneg %p57
        %p566 = pneg %p54
        %s567 = sand.u32 %s36, 1
        %s568 = scalar_lea.sflag [#allocation6], %s567
        %s569 = sand.u32 %s70, 1
        %s570 = smul.addr %s569, 4
        %s571 = scalar_lea.vmem [#allocation5], %s570
        %p572 = pneg %p83
        %p573 = pneg %p80
        %s574 = sand.u32 %s36, 1
        %s575 = scalar_lea.sflag [#allocation6], %s574
        %s576 = sand.u32 %s96, 1
        %s577 = smul.addr %s576, 4
        %s578 = scalar_lea.vmem [#allocation7], %s577
        %p579 = pneg %p109
        %p580 = pneg %p106
        %p581 = pneg %p130
        %p582 = pneg %p127
        %p583 = pneg %p151
        %p584 = pneg %p148
        %p585 = pneg %p172
        %p586 = pneg %p169
        %p587 = pneg %p193
        %p588 = pneg %p190
        %p589 = pneg %p214
        %p590 = pneg %p211
        %p591 = pneg %p235
        %p592 = pneg %p232
        %p593 = pneg %p256
        %p594 = pneg %p253
        %p595 = pneg %p277
        %p596 = pneg %p274
        %p597 = pneg %p298
        %p598 = pneg %p295
        %p599 = pneg %p319
        %p600 = pneg %p316
        %p601 = pneg %p345
        %p602 = pneg %p342
        %s603 = sand.u32 %s332, 1
        %s604 = scalar_lea.sflag [#allocation4], %s603
        %s605 = sand.u32 %s332, 1
        %s606 = smul.addr %s605, 8
        %s607 = scalar_lea.vmem [#allocation17], %s606
        %v609 = vld [vmem:[%s513] sm:$0xf]
        %v610 = vld [vmem:[%s522] sm:$0xf]
        %v611 = vld [vmem:[%s531] sm:$0xf]
        %v612 = vld [vmem:[#allocation8] sm:$0xf]
        %v613 = vld [vmem:[#allocation8 + $0x4] sm:$0xf]
        %v614 = vld [vmem:[#allocation8 + $0x8] sm:$0xf]
        %v615 = vld [vmem:[#allocation8 + $0xc] sm:$0xf]
        %v616 = vld [vmem:[#allocation10] sm:$0x1]
        %v618 = vlaneseq
        %v619 = vshrl.u32 %v618, 7
        %v620 = vsub.s32 0, %v619
        %v621 = vrot.slane %v616, %v620
        %v627 = vunpack.c.l.b16 %v612
        %v628 = vunpack.c.l.b16 %v613
        %v629 = vunpack.c.l.b16 %v614
        %v630 = vunpack.c.l.b16 %v615
        %v631 = vpack.c.b16 %v628, %v627
        %v632 = vpack.c.b16 %v630, %v629
        %vm635 = vcmask 261120
        %v637 = vsel %vm635, %v609, 0
        %639 = vmatprep.subr.bf16.mxu0 0
        %640 = vmatpush1.bf16.msra.mxu0 0
        %641 = vmatprep.subr.bf16.mxu0 0
        %642 = vmatpush1.bf16.msra.mxu0 0
        %643 = vmatprep.subr.bf16.mxu0 0
        %644 = vmatpush1.bf16.msra.mxu0 0
        %645 = vmatprep.subr.bf16.mxu0 0
        %646 = vmatpush1.bf16.msra.mxu0 0
        %647 = vmatprep.subr.bf16.mxu0 0
        %648 = vmatpush1.bf16.msra.mxu0 0
        %649 = vmatprep.subr.bf16.mxu0 0
        %650 = vmatpush1.bf16.msra.mxu0 0
        %651 = vmatprep.subr.bf16.mxu0 0
        %652 = vmatpush1.bf16.msra.mxu0 %v632
        %653 = vmatprep.subr.bf16.mxu0 0
        %654 = vmatpush1.bf16.msra.mxu0 %v631
        %655 = vmatprep.subr.bf16.mxu0 0
        %656 = vmatpush2.bf16.msra.mxu0 0
        %657 = vmatprep.subr.bf16.mxu0 0
        %658 = vmatpush2.bf16.msra.mxu0 0
        %659 = vmatprep.subr.bf16.mxu0 0
        %660 = vmatpush2.bf16.msra.mxu0 0
        %661 = vmatprep.subr.bf16.mxu0 0
        %662 = vmatpush2.bf16.msra.mxu0 0
        %663 = vmatprep.subr.bf16.mxu0 0
        %664 = vmatpush2.bf16.msra.mxu0 0
        %665 = vmatprep.subr.bf16.mxu0 0
        %666 = vmatpush2.bf16.msra.mxu0 0
        %667 = vmatprep.subr.bf16.mxu0 0
        %668 = vmatpush2.bf16.msra.mxu0 0
        %669 = vmatprep.subr.bf16.mxu0 0
        %670 = vmatpush2.bf16.msra.mxu0 0
        %671 = vmatprep.mubr.bf16.mxu0 0
        %672 = vmatmul.mubr.bf16.gmra.mxu0 %v637
        %v673 = vpop.f32.mrf.mxu0
        %v674 = vadd.f32 %v621, %v673
        %v675 = vpop.f32.mrf.mxu0
        %v676 = vpop.f32.mrf.mxu0
        %v677 = vpop.f32.mrf.mxu0
        %678 = vdwg.mxu0
        %v679 = vpack.c.bf16 %v674, %v674
        %v680 = vld [vmem:[#allocation11] sm:$0xf]
        %v681 = vld [vmem:[#allocation11 + $0x4] sm:$0xf]
        %v682 = vld [vmem:[#allocation11 + $0x8] sm:$0xf]
        %v683 = vld [vmem:[#allocation11 + $0xc] sm:$0xf]
        %v684 = vld [vmem:[#allocation13] sm:$0x1]
        %v686 = vlaneseq
        %v687 = vshrl.u32 %v686, 7
        %v688 = vsub.s32 0, %v687
        %v689 = vrot.slane %v684, %v688
        %v695 = vunpack.c.l.b16 %v680
        %v696 = vunpack.c.l.b16 %v681
        %v697 = vunpack.c.l.b16 %v682
        %v698 = vunpack.c.l.b16 %v683
        %v699 = vpack.c.b16 %v696, %v695
        %v700 = vpack.c.b16 %v698, %v697
        %v704 = vsel %vm635, %v610, 0
        %706 = vmatprep.subr.bf16.mxu0 0
        %707 = vmatpush1.bf16.msra.mxu0 0
        %708 = vmatprep.subr.bf16.mxu0 0
        %709 = vmatpush1.bf16.msra.mxu0 0
        %710 = vmatprep.subr.bf16.mxu0 0
        %711 = vmatpush1.bf16.msra.mxu0 0
        %712 = vmatprep.subr.bf16.mxu0 0
        %713 = vmatpush1.bf16.msra.mxu0 0
        %714 = vmatprep.subr.bf16.mxu0 0
        %715 = vmatpush1.bf16.msra.mxu0 0
        %716 = vmatprep.subr.bf16.mxu0 0
        %717 = vmatpush1.bf16.msra.mxu0 0
        %718 = vmatprep.subr.bf16.mxu0 0
        %719 = vmatpush1.bf16.msra.mxu0 %v700
        %720 = vmatprep.subr.bf16.mxu0 0
        %721 = vmatpush1.bf16.msra.mxu0 %v699
        %722 = vmatprep.subr.bf16.mxu0 0
        %723 = vmatpush2.bf16.msra.mxu0 0
        %724 = vmatprep.subr.bf16.mxu0 0
        %725 = vmatpush2.bf16.msra.mxu0 0
        %726 = vmatprep.subr.bf16.mxu0 0
        %727 = vmatpush2.bf16.msra.mxu0 0
        %728 = vmatprep.subr.bf16.mxu0 0
        %729 = vmatpush2.bf16.msra.mxu0 0
        %730 = vmatprep.subr.bf16.mxu0 0
        %731 = vmatpush2.bf16.msra.mxu0 0
        %732 = vmatprep.subr.bf16.mxu0 0
        %733 = vmatpush2.bf16.msra.mxu0 0
        %734 = vmatprep.subr.bf16.mxu0 0
        %735 = vmatpush2.bf16.msra.mxu0 0
        %736 = vmatprep.subr.bf16.mxu0 0
        %737 = vmatpush2.bf16.msra.mxu0 0
        %738 = vmatprep.mubr.bf16.mxu0 0
        %739 = vmatmul.mubr.bf16.gmra.mxu0 %v704
        %v740 = vpop.f32.mrf.mxu0
        %v741 = vadd.f32 %v689, %v740
        %v742 = vpop.f32.mrf.mxu0
        %v743 = vpop.f32.mrf.mxu0
        %v744 = vpop.f32.mrf.mxu0
        %745 = vdwg.mxu0
        %v746 = vpack.c.bf16 %v741, %v741
        %v747 = vld [vmem:[#allocation14] sm:$0xf]
        %v748 = vld [vmem:[#allocation14 + $0x4] sm:$0xf]
        %v749 = vld [vmem:[#allocation14 + $0x8] sm:$0xf]
        %v750 = vld [vmem:[#allocation14 + $0xc] sm:$0xf]
        %v751 = vld [vmem:[#allocation16] sm:$0x1]
        %v753 = vlaneseq
        %v754 = vshrl.u32 %v753, 7
        %v755 = vsub.s32 0, %v754
        %v756 = vrot.slane %v751, %v755
        %v762 = vunpack.c.l.b16 %v747
        %v763 = vunpack.c.l.b16 %v748
        %v764 = vunpack.c.l.b16 %v749
        %v765 = vunpack.c.l.b16 %v750
        %v766 = vpack.c.b16 %v763, %v762
        %v767 = vpack.c.b16 %v765, %v764
        %v771 = vsel %vm635, %v611, 0
        %773 = vmatprep.subr.bf16.mxu0 0
        %774 = vmatpush1.bf16.msra.mxu0 0
        %775 = vmatprep.subr.bf16.mxu0 0
        %776 = vmatpush1.bf16.msra.mxu0 0
        %777 = vmatprep.subr.bf16.mxu0 0
        %778 = vmatpush1.bf16.msra.mxu0 0
        %779 = vmatprep.subr.bf16.mxu0 0
        %780 = vmatpush1.bf16.msra.mxu0 0
        %781 = vmatprep.subr.bf16.mxu0 0
        %782 = vmatpush1.bf16.msra.mxu0 0
        %783 = vmatprep.subr.bf16.mxu0 0
        %784 = vmatpush1.bf16.msra.mxu0 0
        %785 = vmatprep.subr.bf16.mxu0 0
        %786 = vmatpush1.bf16.msra.mxu0 %v767
        %787 = vmatprep.subr.bf16.mxu0 0
        %788 = vmatpush1.bf16.msra.mxu0 %v766
        %789 = vmatprep.subr.bf16.mxu0 0
        %790 = vmatpush2.bf16.msra.mxu0 0
        %791 = vmatprep.subr.bf16.mxu0 0
        %792 = vmatpush2.bf16.msra.mxu0 0
        %793 = vmatprep.subr.bf16.mxu0 0
        %794 = vmatpush2.bf16.msra.mxu0 0
        %795 = vmatprep.subr.bf16.mxu0 0
        %796 = vmatpush2.bf16.msra.mxu0 0
        %797 = vmatprep.subr.bf16.mxu0 0
        %798 = vmatpush2.bf16.msra.mxu0 0
        %799 = vmatprep.subr.bf16.mxu0 0
        %800 = vmatpush2.bf16.msra.mxu0 0
        %801 = vmatprep.subr.bf16.mxu0 0
        %802 = vmatpush2.bf16.msra.mxu0 0
        %803 = vmatprep.subr.bf16.mxu0 0
        %804 = vmatpush2.bf16.msra.mxu0 0
        %805 = vmatprep.mubr.bf16.mxu0 0
        %806 = vmatmul.mubr.bf16.gmra.mxu0 %v771
        %v807 = vpop.f32.mrf.mxu0
        %v808 = vadd.f32 %v756, %v807
        %v809 = vpop.f32.mrf.mxu0
        %v810 = vpop.f32.mrf.mxu0
        %v811 = vpop.f32.mrf.mxu0
        %812 = vdwg.mxu0
        %v813 = vpack.c.bf16 %v808, %v808
        %vm814 = vcmask 130048
        %v816 = vsel %vm814, %v679, 0
        %v819 = vsel %vm814, %v746, 0
        %821 = vmatprep.subr.bf16.mxu0 0
        %822 = vmatpush1.bf16.xpose.msra.mxu0 0
        %823 = vmatprep.subr.bf16.mxu0 0
        %824 = vmatpush1.bf16.xpose.msra.mxu0 0
        %825 = vmatprep.subr.bf16.mxu0 0
        %826 = vmatpush1.bf16.xpose.msra.mxu0 0
        %827 = vmatprep.subr.bf16.mxu0 0
        %828 = vmatpush1.bf16.xpose.msra.mxu0 0
        %829 = vmatprep.subr.bf16.mxu0 0
        %830 = vmatpush1.bf16.xpose.msra.mxu0 0
        %831 = vmatprep.subr.bf16.mxu0 0
        %832 = vmatpush1.bf16.xpose.msra.mxu0 0
        %833 = vmatprep.subr.bf16.mxu0 0
        %834 = vmatpush1.bf16.xpose.msra.mxu0 0
        %835 = vmatprep.subr.bf16.mxu0 0
        %836 = vmatpush1.bf16.xpose.msra.mxu0 %v819
        %837 = vmatprep.subr.bf16.mxu0 0
        %838 = vmatpush2.bf16.xpose.msra.mxu0 0
        %839 = vmatprep.subr.bf16.mxu0 0
        %840 = vmatpush2.bf16.xpose.msra.mxu0 0
        %841 = vmatprep.subr.bf16.mxu0 0
        %842 = vmatpush2.bf16.xpose.msra.mxu0 0
        %843 = vmatprep.subr.bf16.mxu0 0
        %844 = vmatpush2.bf16.xpose.msra.mxu0 0
        %845 = vmatprep.subr.bf16.mxu0 0
        %846 = vmatpush2.bf16.xpose.msra.mxu0 0
        %847 = vmatprep.subr.bf16.mxu0 0
        %848 = vmatpush2.bf16.xpose.msra.mxu0 0
        %849 = vmatprep.subr.bf16.mxu0 0
        %850 = vmatpush2.bf16.xpose.msra.mxu0 0
        %851 = vmatprep.subr.bf16.mxu0 0
        %852 = vmatpush2.bf16.xpose.msra.mxu0 0
        %853 = vmatprep.mubr.bf16.mxu0 0
        %854 = vmatmul.mubr.bf16.gmra.mxu0 %v816
        %v855 = vpop.f32.mrf.mxu0
        %v856 = vadd.f32 0.0, %v855
        %v857 = vpop.f32.mrf.mxu0
        %v858 = vpop.f32.mrf.mxu0
        %v859 = vpop.f32.mrf.mxu0
        %860 = vdwg.mxu0
        %vm861 = vcmask 64512
        %v862 = vsel %vm861, %v856, -inf
        %863 = vmax.xlane.f32.xlu0 %v862
        %v864 = vpop.xlane.xlu0 %863
        %v865 = vsub.f32 %v856, %v864
        %v866 = vmul.f32 %v865, 1.442695
        %v867 = vpow.pop %v866
        %v868 = vsel %vm861, %v867, 0.0
        %869 = vadd.xlane.f32.xlu0 %v868
        %v870 = vpop.xlane.xlu0 %869
        %v871 = vrcp.pop %v870
        %v872 = vmul.f32 %v867, %v871
        %v873 = vpack.c.bf16 %v872, %v872
        %v875 = vsel %vm861, %v873, 0
        %vm877 = vcmask 1043456
        %v879 = vsel %vm877, %v813, 0
        %881 = vmatprep.subr.bf16.mxu0 0
        %882 = vmatpush1.bf16.msra.mxu0 0
        %883 = vmatprep.subr.bf16.mxu0 0
        %884 = vmatpush1.bf16.msra.mxu0 0
        %885 = vmatprep.subr.bf16.mxu0 0
        %886 = vmatpush1.bf16.msra.mxu0 0
        %887 = vmatprep.subr.bf16.mxu0 0
        %888 = vmatpush1.bf16.msra.mxu0 0
        %889 = vmatprep.subr.bf16.mxu0 0
        %890 = vmatpush1.bf16.msra.mxu0 0
        %891 = vmatprep.subr.bf16.mxu0 0
        %892 = vmatpush1.bf16.msra.mxu0 0
        %893 = vmatprep.subr.bf16.mxu0 0
        %894 = vmatpush1.bf16.msra.mxu0 0
        %895 = vmatprep.subr.bf16.mxu0 0
        %896 = vmatpush1.bf16.msra.mxu0 %v879
        %897 = vmatprep.subr.bf16.mxu0 0
        %898 = vmatpush2.bf16.msra.mxu0 0
        %899 = vmatprep.subr.bf16.mxu0 0
        %900 = vmatpush2.bf16.msra.mxu0 0
        %901 = vmatprep.subr.bf16.mxu0 0
        %902 = vmatpush2.bf16.msra.mxu0 0
        %903 = vmatprep.subr.bf16.mxu0 0
        %904 = vmatpush2.bf16.msra.mxu0 0
        %905 = vmatprep.subr.bf16.mxu0 0
        %906 = vmatpush2.bf16.msra.mxu0 0
        %907 = vmatprep.subr.bf16.mxu0 0
        %908 = vmatpush2.bf16.msra.mxu0 0
        %909 = vmatprep.subr.bf16.mxu0 0
        %910 = vmatpush2.bf16.msra.mxu0 0
        %911 = vmatprep.subr.bf16.mxu0 0
        %912 = vmatpush2.bf16.msra.mxu0 0
        %913 = vmatprep.mubr.bf16.mxu0 0
        %914 = vmatmul.mubr.bf16.gmra.mxu0 %v875
        %v915 = vpop.f32.mrf.mxu0
        %v916 = vadd.f32 0.0, %v915
        %v917 = vpop.f32.mrf.mxu0
        %v918 = vpop.f32.mrf.mxu0
        %v919 = vpop.f32.mrf.mxu0
        %920 = vdwg.mxu0
        %v921 = vpack.c.bf16 %v916, %v916
        %923 = vrot.lane.b32.xlu0 %v679, 112
        %v924 = vpop.permute.xlu0 %923
        %926 = vrot.lane.b32.xlu0 %v746, 112
        %v927 = vpop.permute.xlu0 %926
        %v929 = vsel %vm814, %v924, 0
        %v932 = vsel %vm814, %v927, 0
        %934 = vmatprep.subr.bf16.mxu0 0
        %935 = vmatpush1.bf16.xpose.msra.mxu0 0
        %936 = vmatprep.subr.bf16.mxu0 0
        %937 = vmatpush1.bf16.xpose.msra.mxu0 0
        %938 = vmatprep.subr.bf16.mxu0 0
        %939 = vmatpush1.bf16.xpose.msra.mxu0 0
        %940 = vmatprep.subr.bf16.mxu0 0
        %941 = vmatpush1.bf16.xpose.msra.mxu0 0
        %942 = vmatprep.subr.bf16.mxu0 0
        %943 = vmatpush1.bf16.xpose.msra.mxu0 0
        %944 = vmatprep.subr.bf16.mxu0 0
        %945 = vmatpush1.bf16.xpose.msra.mxu0 0
        %946 = vmatprep.subr.bf16.mxu0 0
        %947 = vmatpush1.bf16.xpose.msra.mxu0 0
        %948 = vmatprep.subr.bf16.mxu0 0
        %949 = vmatpush1.bf16.xpose.msra.mxu0 %v932
        %950 = vmatprep.subr.bf16.mxu0 0
        %951 = vmatpush2.bf16.xpose.msra.mxu0 0
        %952 = vmatprep.subr.bf16.mxu0 0
        %953 = vmatpush2.bf16.xpose.msra.mxu0 0
        %954 = vmatprep.subr.bf16.mxu0 0
        %955 = vmatpush2.bf16.xpose.msra.mxu0 0
        %956 = vmatprep.subr.bf16.mxu0 0
        %957 = vmatpush2.bf16.xpose.msra.mxu0 0
        %958 = vmatprep.subr.bf16.mxu0 0
        %959 = vmatpush2.bf16.xpose.msra.mxu0 0
        %960 = vmatprep.subr.bf16.mxu0 0
        %961 = vmatpush2.bf16.xpose.msra.mxu0 0
        %962 = vmatprep.subr.bf16.mxu0 0
        %963 = vmatpush2.bf16.xpose.msra.mxu0 0
        %964 = vmatprep.subr.bf16.mxu0 0
        %965 = vmatpush2.bf16.xpose.msra.mxu0 0
        %966 = vmatprep.mubr.bf16.mxu0 0
        %967 = vmatmul.mubr.bf16.gmra.mxu0 %v929
        %v968 = vpop.f32.mrf.mxu0
        %v969 = vadd.f32 0.0, %v968
        %v970 = vpop.f32.mrf.mxu0
        %v971 = vpop.f32.mrf.mxu0
        %v972 = vpop.f32.mrf.mxu0
        %973 = vdwg.mxu0
        %v974 = vsel %vm861, %v969, -inf
        %975 = vmax.xlane.f32.xlu0 %v974
        %v976 = vpop.xlane.xlu0 %975
        %v977 = vsub.f32 %v969, %v976
        %v978 = vmul.f32 %v977, 1.442695
        %v979 = vpow.pop %v978
        %v980 = vsel %vm861, %v979, 0.0
        %981 = vadd.xlane.f32.xlu0 %v980
        %v982 = vpop.xlane.xlu0 %981
        %v983 = vrcp.pop %v982
        %v984 = vmul.f32 %v979, %v983
        %v985 = vpack.c.bf16 %v984, %v984
        %987 = vrot.lane.b32.xlu0 %v813, 112
        %v988 = vpop.permute.xlu0 %987
        %v990 = vsel %vm861, %v985, 0
        %v993 = vsel %vm877, %v988, 0
        %995 = vmatprep.subr.bf16.mxu0 0
        %996 = vmatpush1.bf16.msra.mxu0 0
        %997 = vmatprep.subr.bf16.mxu0 0
        %998 = vmatpush1.bf16.msra.mxu0 0
        %999 = vmatprep.subr.bf16.mxu0 0
        %1000 = vmatpush1.bf16.msra.mxu0 0
        %1001 = vmatprep.subr.bf16.mxu0 0
        %1002 = vmatpush1.bf16.msra.mxu0 0
        %1003 = vmatprep.subr.bf16.mxu0 0
        %1004 = vmatpush1.bf16.msra.mxu0 0
        %1005 = vmatprep.subr.bf16.mxu0 0
        %1006 = vmatpush1.bf16.msra.mxu0 0
        %1007 = vmatprep.subr.bf16.mxu0 0
        %1008 = vmatpush1.bf16.msra.mxu0 0
        %1009 = vmatprep.subr.bf16.mxu0 0
        %1010 = vmatpush1.bf16.msra.mxu0 %v993
        %1011 = vmatprep.subr.bf16.mxu0 0
        %1012 = vmatpush2.bf16.msra.mxu0 0
        %1013 = vmatprep.subr.bf16.mxu0 0
        %1014 = vmatpush2.bf16.msra.mxu0 0
        %1015 = vmatprep.subr.bf16.mxu0 0
        %1016 = vmatpush2.bf16.msra.mxu0 0
        %1017 = vmatprep.subr.bf16.mxu0 0
        %1018 = vmatpush2.bf16.msra.mxu0 0
        %1019 = vmatprep.subr.bf16.mxu0 0
        %1020 = vmatpush2.bf16.msra.mxu0 0
        %1021 = vmatprep.subr.bf16.mxu0 0
        %1022 = vmatpush2.bf16.msra.mxu0 0
        %1023 = vmatprep.subr.bf16.mxu0 0
        %1024 = vmatpush2.bf16.msra.mxu0 0
        %1025 = vmatprep.subr.bf16.mxu0 0
        %1026 = vmatpush2.bf16.msra.mxu0 0
        %1027 = vmatprep.mubr.bf16.mxu0 0
        %1028 = vmatmul.mubr.bf16.gmra.mxu0 %v990
        %v1029 = vpop.f32.mrf.mxu0
        %v1030 = vadd.f32 0.0, %v1029
        %v1031 = vpop.f32.mrf.mxu0
        %v1032 = vpop.f32.mrf.mxu0
        %v1033 = vpop.f32.mrf.mxu0
        %1034 = vdwg.mxu0
        %v1035 = vpack.c.bf16 %v1030, %v1030
        %1037 = vrot.lane.b32.xlu0 %v1035, 16
        %v1038 = vpop.permute.xlu0 %1037
        %v1041 = vsel %vm814, %v921, %v1038
        %v1042 = vld [vmem:[%s9] sm:$0xf]
        %v1043 = vld [vmem:[%s9 + $0x4] sm:$0xf]
        %v1044 = vld [vmem:[%s9 + $0x8] sm:$0xf]
        %v1045 = vld [vmem:[%s9 + $0xc] sm:$0xf]
        %v1050 = vunpack.c.l.b16 %v1042
        %v1051 = vunpack.c.l.b16 %v1043
        %v1052 = vunpack.c.l.b16 %v1044
        %v1053 = vunpack.c.l.b16 %v1045
        %v1054 = vpack.c.b16 %v1051, %v1050
        %v1055 = vpack.c.b16 %v1053, %v1052
        %v1058 = vsel %vm635, %v1041, 0
        %1060 = vmatprep.subr.bf16.mxu0 0
        %1061 = vmatpush1.bf16.msra.mxu0 0
        %1062 = vmatprep.subr.bf16.mxu0 0
        %1063 = vmatpush1.bf16.msra.mxu0 0
        %1064 = vmatprep.subr.bf16.mxu0 0
        %1065 = vmatpush1.bf16.msra.mxu0 0
        %1066 = vmatprep.subr.bf16.mxu0 0
        %1067 = vmatpush1.bf16.msra.mxu0 0
        %1068 = vmatprep.subr.bf16.mxu0 0
        %1069 = vmatpush1.bf16.msra.mxu0 0
        %1070 = vmatprep.subr.bf16.mxu0 0
        %1071 = vmatpush1.bf16.msra.mxu0 0
        %1072 = vmatprep.subr.bf16.mxu0 0
        %1073 = vmatpush1.bf16.msra.mxu0 %v1055
        %1074 = vmatprep.subr.bf16.mxu0 0
        %1075 = vmatpush1.bf16.msra.mxu0 %v1054
        %1076 = vmatprep.subr.bf16.mxu0 0
        %1077 = vmatpush2.bf16.msra.mxu0 0
        %1078 = vmatprep.subr.bf16.mxu0 0
        %1079 = vmatpush2.bf16.msra.mxu0 0
        %1080 = vmatprep.subr.bf16.mxu0 0
        %1081 = vmatpush2.bf16.msra.mxu0 0
        %1082 = vmatprep.subr.bf16.mxu0 0
        %1083 = vmatpush2.bf16.msra.mxu0 0
        %1084 = vmatprep.subr.bf16.mxu0 0
        %1085 = vmatpush2.bf16.msra.mxu0 0
        %1086 = vmatprep.subr.bf16.mxu0 0
        %1087 = vmatpush2.bf16.msra.mxu0 0
        %1088 = vmatprep.subr.bf16.mxu0 0
        %1089 = vmatpush2.bf16.msra.mxu0 0
        %1090 = vmatprep.subr.bf16.mxu0 0
        %1091 = vmatpush2.bf16.msra.mxu0 0
        %1092 = vmatprep.mubr.bf16.mxu0 0
        %1093 = vmatmul.mubr.bf16.gmra.mxu0 %v1058
        %v1094 = vpop.f32.mrf.mxu0
        %v1095 = vadd.f32 0.0, %v1094
        %v1096 = vpop.f32.mrf.mxu0
        %v1097 = vpop.f32.mrf.mxu0
        %v1098 = vpop.f32.mrf.mxu0
        %1099 = vdwg.mxu0
        %v1100 = vld [vmem:[%s10] sm:$0x1]
        %v1102 = vlaneseq
        %v1103 = vshrl.u32 %v1102, 7
        %v1104 = vsub.s32 0, %v1103
        %v1105 = vrot.slane %v1100, %v1104
        %v1107 = vadd.f32 %v1095, %v1105
        %v1108 = vld [vmem:[%s513] sm:$0xf]
        %v1109 = vunpack.c.l.bf16 %v1108
        %v1110 = vadd.f32 %v1107, %v1109
        %v1111 = vsel %vm635, %v1110, 0.0
        %1112 = vadd.xlane.f32.xlu0 %v1111
        %v1113 = vpop.xlane.xlu0 %1112
        %v1114 = vrcp.pop 32.0
        %v1115 = vmul.f32 %v1113, %v1114
        %v1116 = vsub.f32 %v1110, %v1115
        %v1117 = vmul.f32 %v1116, %v1116
        %v1118 = vsel %vm635, %v1117, 0.0
        %1119 = vadd.xlane.f32.xlu0 %v1118
        %v1120 = vpop.xlane.xlu0 %1119
        %v1121 = vmul.f32 %v1120, %v1114
        %v1122 = vadd.f32 %v1121, 1e-05
        %v1123 = vrsqrt.pop %v1122
        %v1124 = vmul.f32 %v1116, %v1123
        %v1125 = vld [vmem:[%s11] sm:$0x1]
        %v1127 = vlaneseq
        %v1128 = vshrl.u32 %v1127, 7
        %v1129 = vsub.s32 0, %v1128
        %v1130 = vrot.slane %v1125, %v1129
        %v1132 = vmul.f32 %v1124, %v1130
        %v1133 = vld [vmem:[%s12] sm:$0x1]
        %v1135 = vlaneseq
        %v1136 = vshrl.u32 %v1135, 7
        %v1137 = vsub.s32 0, %v1136
        %v1138 = vrot.slane %v1133, %v1137
        %v1140 = vadd.f32 %v1132, %v1138
        %1141 = vst.msk [vmem:[%s607] sm:$0xff] %vm635, %v1140
        %s1142 = sand.u32 %s332, 1
        %s1143 = scalar_lea.sflag [#allocation4], %s1142
        %s1144 = sand.u32 %s332, 1
        %s1145 = smul.addr %s1144, 8
        %s1146 = scalar_lea.vmem [#allocation17], %s1145
        // Predicated region
        $region109: #{tpu_custom_call.1} parent=71 // pred_check
          %p1147 = pneg %p342
        $region110: #{tpu_custom_call.1} parent=71 // pred_check_branch
          %1149 = sbr.rel (%p1147) target = $region112
        $region111: #{tpu_custom_call.1} parent=71 // pred_region
          %s1151 = ssub.s32 128, 128
          %1152 = vsyncadd %s1143, %s1151
          %s1153 = smul.addr %s36, 128
          %s1154 = scalar_lea.hbm %s13, %s1153
          %s1156 = sshll.u32 %s1146, 4
          %s1157 = int_to_ptr.vmem [resolvable:$true] %s1156
          %1159 = dma.vmem_to_hbm [thread:$0]  %s1157, 128, %s1154, %s1143
        $region112: #{tpu_custom_call.1} parent=71 // pred_fallthru
          _
      $region72: #{tpu_custom_call.1} parent=5 // pred_fallthru
        _
      %p1160 = scmp.le.s32.totalorder 2, %s31
      // Predicated region
      $region113: #{tpu_custom_call.1} parent=5 // pred_check
        %p1161 = pneg %p1160
      $region114: #{tpu_custom_call.1} parent=5 // pred_check_branch
        %1163 = sbr.rel (%p1161) target = $region116
      $region115: #{tpu_custom_call.1} parent=5 // pred_region
        %s1164 = ssub.s32 %s31, 2
        // Predicated region
        $region117: #{tpu_custom_call.1} parent=115 // pred_check
          %p1165 = pneg %p348
        $region118: #{tpu_custom_call.1} parent=115 // pred_check_branch
          %1167 = sbr.rel (%p1165) target = $region120
        $region119: #{tpu_custom_call.1} parent=115 // pred_region
          %s1168 = sand.u32 %s333, 1
          %s1169 = scalar_lea.sflag [#allocation4], %s1168
          %s1170 = sand.u32 %s333, 1
          %s1171 = smul.addr %s1170, 8
          %s1172 = scalar_lea.vmem [#allocation17], %s1171
          %1173 = dma.done %s1169, 128
        $region120: #{tpu_custom_call.1} parent=115 // pred_fallthru
          _
      $region116: #{tpu_custom_call.1} parent=5 // pred_fallthru
        _
    $region6: #{tpu_custom_call.1} parent=1 // loop_footer
      %s35 = sadd.s32 1, %s31
    $region7: #{tpu_custom_call.1} parent=1 // loop_footer_branch
      %30 = sbr.rel target = $region3
    $region8: #{tpu_custom_call.1} parent=1 // loop_exit
      _
    %1174 = vsyncpa [#allocation3], 1
    %s1175 = scalar_lea.sflag [#allocation3], 1
    %1176 = vsyncpa %s1175, 1
    %1177 = vsyncpa [#allocation6], 1
    %s1178 = scalar_lea.sflag [#allocation6], 1
    %1179 = vsyncpa %s1178, 1
    %1180 = vsyncpa [#allocation9], 1
    %1181 = vsyncpa [#allocation12], 1
    %1182 = vsyncpa [#allocation15], 1
    %1183 = vsyncpa [#allocation4], 1
    %s1184 = scalar_lea.sflag [#allocation4], 1
    %1185 = vsyncpa %s1184, 1

</llo_original>
